<compile_context>
chip_gen: v6e
topology: v6e:2x2x1
jax: 0.10.0
libtpu: 0.0.40
codegen_flags: <defaults>
</compile_context>

<pallas_src>
import functools

import jax
import jax.numpy as jnp
from jax.experimental import pallas as pl
from jax.experimental.pallas import tpu as pltpu

BIGNUMBER = 100000.0


def _round_up(x, m):
    return (x + m - 1) // m * m


def decode_step_kernel(
    xhc_ref,     # (TB, 3H) f32   [decoder_inp | h0 | c0]
    ctx_ref,     # (TB, N, H)     context (compute dtype)
    e_ref,       # (TB, N, H)     precomputed ctx @ W_ref^T + b_ref
    gbias_ref,   # (TB, N) f32    additive glimpse-logit bias (-1e5 * mask/pad)
    pbias_ref,   # (TB, N) f32    additive pointer-logit bias
    w_cat_ref,   # (2H, 4*Hg)     fused [W_ih | W_hh]^T, gate-padded to Hg lanes
    b_ref,       # (1, 4*Hg) f32  b_ih + b_hh, gate-padded
    wq_ref,      # (H, H)         W_query^T
    bq_ref,      # (1, H) f32
    v_ref,       # (1, H) f32
    logit_ref,   # out (TB, N) f32
    hc_ref,      # out (TB, 2H) f32  [h1 | c1]
    *,
    hidden_dim: int,
    gate_stride: int,
    n_glimpses: int,
    approx_recip: bool,
):
    H = hidden_dim
    Hg = gate_stride

    xhc = xhc_ref[...]
    xh = xhc[:, : 2 * H]
    c0 = xhc[:, 2 * H:]

    # ---- LSTM cell: single fused MXU matmul for all 4 gates ----------------
    w_cat = w_cat_ref[...]
    gates = (
        jnp.dot(xh.astype(w_cat.dtype), w_cat, preferred_element_type=jnp.float32)
        + b_ref[...]
    )  # (TB, 4*Hg), PyTorch gate order i, f, g, o; each gate starts at lane k*Hg
    i_g = jax.nn.sigmoid(gates[:, 0 * Hg: 0 * Hg + H])
    f_g = jax.nn.sigmoid(gates[:, 1 * Hg: 1 * Hg + H])
    g_g = jnp.tanh(gates[:, 2 * Hg: 2 * Hg + H])
    o_g = jax.nn.sigmoid(gates[:, 3 * Hg: 3 * Hg + H])
    c1 = f_g * c0 + i_g * g_g
    h1 = o_g * jnp.tanh(c1)
    hc_ref[...] = jnp.concatenate([h1, c1], axis=-1)

    # ---- loop-invariant loads / casts hoisted out of the glimpse loop ------
    e = e_ref[...].astype(jnp.float32)        # (TB, N, H)
    ctx = ctx_ref[...].astype(jnp.float32)    # (TB, N, H)
    wq = wq_ref[...]                          # (H, H), pre-transposed
    bq = bq_ref[...]                          # (1, H)
    vb = v_ref[...][None, :, :].astype(jnp.float32)   # (1, 1, H)
    gbias = gbias_ref[...]                    # (TB, N)

    def attn_logit(query):                    # (TB, H) -> (TB, N)
        q = jnp.dot(query.astype(wq.dtype), wq,
                    preferred_element_type=jnp.float32) + bq
        t = jnp.tanh(e + q[:, None, :])       # (TB, N, H)
        # Lane-reduce over H kept on the XLU; an MXU matvec here would force a
        # sublane<->lane relayout that costs more at these H/N.
        return jnp.sum(t * vb, axis=-1)

    # ---- glimpses (weights shared with the pointer, as in the module) ------
    last_hidden = h1
    for _ in range(n_glimpses):
        logit = attn_logit(last_hidden) + gbias
        logit = logit - jnp.max(logit, axis=1, keepdims=True)
        p = jnp.exp(logit)
        denom = jnp.sum(p, axis=1, keepdims=True)
        if approx_recip:
            p = p * pl.reciprocal(denom, approx=True)   # EUP vrcp
        else:
            p = p / denom
        last_hidden = jnp.sum(p[:, :, None] * ctx, axis=1)   # (TB, H)

    # ---- pointer ------------------------------------------------------------
    logit_ref[...] = attn_logit(last_hidden) + pbias_ref[...]


def precompute_attention_keys(params, context):
    """Query-independent attention term; constant across a whole decode loop."""
    return jnp.einsum(
        "bnh,oh->bno",
        context.astype(jnp.float32),
        params["w_ref"].astype(jnp.float32),
    ) + params["b_ref"].astype(jnp.float32)


def _choose_tile_and_vmem(B, N_pad, H, Hg, ce_itemsize, batch_tile):
    """Generation-aware batch tile + scoped-VMEM limit."""
    b8 = _round_up(B, 8)
    try:
        cap = int(getattr(pltpu.get_tpu_info(), "vmem_capacity_bytes"))
    except Exception:
        cap = 64 << 20   # conservative fallback (v7x per-TC VMEM)
    vmem_limit = int(min(cap * 3 // 4, 96 << 20))
    if batch_tile is not None:
        return min(_round_up(max(8, batch_tile), 8), b8), vmem_limit
    # double-buffered weight footprint (4 B/elem upper bound)
    w_bytes = 2 * 4 * (2 * H * 4 * Hg + 4 * Hg + H * H + 2 * H + H)
    # per-batch-row, double-buffered activation footprint (ctx + e dominate)
    row_bytes = 2 * (ce_itemsize * 2 * N_pad * H          # ctx + e
                     + 4 * (3 * H + 2 * N_pad)            # xhc + biases
                     + 4 * (N_pad + 2 * H))               # logit + hc
    budget = vmem_limit - w_bytes - (2 << 20)
    tb = max(8, min(256, (budget // max(row_bytes, 1)) // 8 * 8))
    # Chips with <=64 MiB VMEM/TC (v7x) have 2 TensorCores: keep >=2 grid
    # steps so the "parallel" batch axis actually shards across both.
    if cap <= (64 << 20) and b8 > 8:
        tb = min(tb, _round_up((b8 + 1) // 2, 8))
    return min(tb, b8), vmem_limit


def decode_step(params, decoder_inp, context, mask, hidden=None,
                n_glimpses=1, mask_glimpses=True, mask_pointer=True,
                batch_tile=None, attn_e=None,
                compute_dtype=jnp.float32, approx_softmax_recip=True):
    """DecodeStep forward. Returns (logit, (h1, c1)) with h1/c1 shaped
    (num_layers=1, B, H) to mirror the PyTorch LSTM hidden format.
    Pass `attn_e=precompute_attention_keys(params, context)` to reuse the
    query-independent attention term across a decode loop."""
    f32 = jnp.float32
    B, H = decoder_inp.shape
    N = context.shape[1]

    decoder_inp = decoder_inp.astype(f32)
    context = context.astype(f32)
    mask = mask.astype(f32)

    if hidden is None:
        h0 = jnp.zeros((B, H), f32)
        c0 = jnp.zeros((B, H), f32)
    else:
        h0 = hidden[0].reshape(B, H).astype(f32)
        c0 = hidden[1].reshape(B, H).astype(f32)

    # ---- hoisted: query-independent attention keys --------------------------
    if attn_e is None:
        attn_e = precompute_attention_keys(params, context)
    attn_e = attn_e.astype(f32)

    # ---- host-side weight prep (fuse, pre-transpose, lane-align gates) ------
    Hg = _round_up(H, 128)
    w_cat_t = jnp.concatenate([params["w_ih"], params["w_hh"]], axis=1).T  # (2H, 4H)
    w_cat_t = w_cat_t.reshape(2 * H, 4, H)
    w_cat_t = jnp.pad(w_cat_t, ((0, 0), (0, 0), (0, Hg - H))).reshape(2 * H, 4 * Hg)
    b_sum = (params["b_ih"] + params["b_hh"]).reshape(4, H).astype(f32)
    b_sum = jnp.pad(b_sum, ((0, 0), (0, Hg - H))).reshape(1, 4 * Hg)
    wq_t = params["w_q"].T
    bq = params["b_q"].reshape(1, H).astype(f32)
    v = params["v"].reshape(1, H).astype(f32)

    # ---- padding: N to a sublane multiple, B to the batch tile --------------
    N_pad = _round_up(N, 8)
    ce_item = jnp.dtype(compute_dtype).itemsize
    TB, vmem_limit = _choose_tile_and_vmem(B, N_pad, H, Hg, ce_item, batch_tile)
    B_pad = _round_up(B, TB)
    padB, padN = B_pad - B, N_pad - N

    xhc = jnp.concatenate([decoder_inp, h0, c0], axis=1)       # (B, 3H)
    if padB:
        xhc = jnp.pad(xhc, ((0, padB), (0, 0)))
    if padB or padN:
        context = jnp.pad(context, ((0, padB), (0, padN), (0, 0)))
        attn_e = jnp.pad(attn_e, ((0, padB), (0, padN), (0, 0)))
        mask = jnp.pad(mask, ((0, padB), (0, padN)))

    # mask flags + N padding baked into additive logit biases host-side.
    pad_col = (jnp.arange(N_pad) >= N).astype(f32)[None, :]
    g_m = mask if mask_glimpses else jnp.zeros_like(mask)
    p_m = mask if mask_pointer else jnp.zeros_like(mask)
    gbias = -BIGNUMBER * (g_m + pad_col)
    pbias = -BIGNUMBER * (p_m + pad_col)

    # matmul/HBM dtype (opt-in bf16 for v6e/v7x); elementwise math stays f32.
    ctx_c = context.astype(compute_dtype)
    e_c = attn_e.astype(compute_dtype)
    w_cat_c = w_cat_t.astype(compute_dtype)
    wq_c = wq_t.astype(compute_dtype)

    kernel = functools.partial(
        decode_step_kernel,
        hidden_dim=H,
        gate_stride=Hg,
        n_glimpses=n_glimpses,
        approx_recip=approx_softmax_recip,
    )

    grid = (B_pad // TB,)
    bmap2 = lambda i: (i, 0)
    bmap3 = lambda i: (i, 0, 0)
    fixed = lambda i: (0, 0)

    in_specs = [
        pl.BlockSpec((TB, 3 * H), bmap2),          # xhc
        pl.BlockSpec((TB, N_pad, H), bmap3),       # context
        pl.BlockSpec((TB, N_pad, H), bmap3),       # attn_e (hoisted term)
        pl.BlockSpec((TB, N_pad), bmap2),          # glimpse bias
        pl.BlockSpec((TB, N_pad), bmap2),          # pointer bias
        pl.BlockSpec((2 * H, 4 * Hg), fixed),      # fused LSTM weights
        pl.BlockSpec((1, 4 * Hg), fixed),          # lstm bias
        pl.BlockSpec((H, H), fixed),               # wq^T
        pl.BlockSpec((1, H), fixed),               # bq
        pl.BlockSpec((1, H), fixed),               # v
    ]
    out_specs = (
        pl.BlockSpec((TB, N_pad), bmap2),          # logit
        pl.BlockSpec((TB, 2 * H), bmap2),          # [h1 | c1]
    )

    # Advisory cost estimate for XLA scheduling.
    n_attn = n_glimpses + 1
    flops = (2 * B_pad * (2 * H) * (4 * Hg)
             + n_attn * (2 * B_pad * H * H + 2 * B_pad * N_pad * H)
             + n_glimpses * 2 * B_pad * N_pad * H)
    transcendentals = (B_pad * 5 * H
                       + n_attn * B_pad * N_pad * H
                       + n_glimpses * B_pad * N_pad)
    bytes_accessed = (xhc.size * 4 + ctx_c.size * ce_item + e_c.size * ce_item
                      + gbias.size * 4 + pbias.size * 4
                      + w_cat_c.size * ce_item + b_sum.size * 4
                      + wq_c.size * ce_item + bq.size * 4 + v.size * 4
                      + B_pad * N_pad * 4 + B_pad * 2 * H * 4)

    logit, hc = pl.pallas_call(
        kernel,
        grid=grid,
        in_specs=in_specs,
        out_specs=out_specs,
        out_shape=(
            jax.ShapeDtypeStruct((B_pad, N_pad), f32),
            jax.ShapeDtypeStruct((B_pad, 2 * H), f32),
        ),
        compiler_params=pltpu.CompilerParams(
            dimension_semantics=("parallel",),
            vmem_limit_bytes=int(vmem_limit),
        ),
        cost_estimate=pl.CostEstimate(
            flops=int(flops),
            transcendentals=int(transcendentals),
            bytes_accessed=int(bytes_accessed),
        ),
    )(xhc, ctx_c, e_c, gbias, pbias, w_cat_c, b_sum, wq_c, bq, v)

    logit = logit[:B, :N]
    h1 = hc[:B, :H]
    c1 = hc[:B, H:]
    return logit, (h1[None], c1[None])


def ref_decode_step(params, decoder_inp, context, mask, hidden=None,
                    n_glimpses=1, mask_glimpses=True, mask_pointer=True):
    """Pure-JAX reference (mirrors the PyTorch forward)."""
    B, H = decoder_inp.shape
    h0 = jnp.zeros((B, H)) if hidden is None else hidden[0].reshape(B, H)
    c0 = jnp.zeros((B, H)) if hidden is None else hidden[1].reshape(B, H)
    gates = (decoder_inp @ params["w_ih"].T + h0 @ params["w_hh"].T
             + params["b_ih"] + params["b_hh"])
    i = jax.nn.sigmoid(gates[:, 0 * H:1 * H])
    f = jax.nn.sigmoid(gates[:, 1 * H:2 * H])
    g = jnp.tanh(gates[:, 2 * H:3 * H])
    o = jax.nn.sigmoid(gates[:, 3 * H:4 * H])
    c1 = f * c0 + i * g
    h1 = o * jnp.tanh(c1)

    e = jnp.einsum("bnh,oh->bno", context, params["w_ref"]) + params["b_ref"]

    def attn(q):
        qq = q @ params["w_q"].T + params["b_q"]
        return jnp.sum(jnp.tanh(e + qq[:, None, :]) * params["v"], axis=-1)

    last_hidden = h1
    for _ in range(n_glimpses):
        logit = attn(last_hidden)
        if mask_glimpses:
            logit = logit - BIGNUMBER * mask
        p = jax.nn.softmax(logit, axis=1)
        last_hidden = jnp.sum(p[:, :, None] * context, axis=1)
    logit = attn(last_hidden)
    if mask_pointer:
        logit = logit - BIGNUMBER * mask
    return logit, (h1[None], c1[None])


def init_params(key, hidden_dim):
    H = hidden_dim
    ks = jax.random.split(key, 9)
    s = 0.1
    return {
        "w_ih": s * jax.random.normal(ks[0], (4 * H, H), jnp.float32),
        "w_hh": s * jax.random.normal(ks[1], (4 * H, H), jnp.float32),
        "b_ih": s * jax.random.normal(ks[2], (4 * H,), jnp.float32),
        "b_hh": s * jax.random.normal(ks[3], (4 * H,), jnp.float32),
        "w_q": s * jax.random.normal(ks[4], (H, H), jnp.float32),
        "b_q": s * jax.random.normal(ks[5], (H,), jnp.float32),
        "w_ref": s * jax.random.normal(ks[6], (H, H), jnp.float32),
        "b_ref": s * jax.random.normal(ks[7], (H,), jnp.float32),
        "v": s * jax.random.normal(ks[8], (H,), jnp.float32),
    }


if __name__ == "__main__":
    B, H, N = 2, 32, 8
    n_glimpses = 1

    key = jax.random.PRNGKey(0)
    kp, kx, kc, km = jax.random.split(key, 4)
    params = init_params(kp, H)
    decoder_inp = jax.random.normal(kx, (B, H), jnp.float32)
    context = jax.random.normal(kc, (B, N, H), jnp.float32)
    # mask: 0/1 float, a couple of nodes already visited
    mask = (jax.random.uniform(km, (B, N)) < 0.25).astype(jnp.float32)

    logit, (h1, c1) = decode_step(params, decoder_inp, context, mask,
                                  hidden=None, n_glimpses=n_glimpses)
    jax.block_until_ready((logit, h1, c1))

    logit_r, (h1_r, c1_r) = ref_decode_step(
        params, decoder_inp, context, mask, hidden=None, n_glimpses=n_glimpses)

    assert jnp.allclose(logit, logit_r, rtol=1e-4, atol=1e-3), "logit mismatch"
    assert jnp.allclose(h1, h1_r, rtol=1e-4, atol=1e-5), "h mismatch"
    assert jnp.allclose(c1, c1_r, rtol=1e-4, atol=1e-5), "c mismatch"

    print("KERNEL_OK")
</pallas_src>

<mosaic_0001>
module attributes {stable_mosaic.version = 11 : i64} {
  func.func @decode_step_kernel(%arg0: i32, %arg1: memref<8x96xf32, #tpu.memory_space<vmem>>, %arg2: memref<8x8x32xf32, #tpu.memory_space<vmem>>, %arg3: memref<8x8x32xf32, #tpu.memory_space<vmem>>, %arg4: memref<8x8xf32, #tpu.memory_space<vmem>>, %arg5: memref<8x8xf32, #tpu.memory_space<vmem>>, %arg6: memref<64x512xf32, #tpu.memory_space<vmem>>, %arg7: memref<1x512xf32, #tpu.memory_space<vmem>>, %arg8: memref<32x32xf32, #tpu.memory_space<vmem>>, %arg9: memref<1x32xf32, #tpu.memory_space<vmem>>, %arg10: memref<1x32xf32, #tpu.memory_space<vmem>>, %arg11: memref<8x8xf32, #tpu.memory_space<vmem>>, %arg12: memref<8x64xf32, #tpu.memory_space<vmem>>) attributes {dimension_semantics = [#tpu.dimension_semantics<parallel>], iteration_bounds = array<i64: 1>, scalar_prefetch = 0 : i64, scratch_operands = 0 : i64, tpu.core_type = #tpu.core_type<tc>, window_params = [{transform_indices = @transform_0, window_bounds = array<i64: 8, 96>}, {transform_indices = @transform_1, window_bounds = array<i64: 8, 8, 32>}, {transform_indices = @transform_2, window_bounds = array<i64: 8, 8, 32>}, {transform_indices = @transform_3, window_bounds = array<i64: 8, 8>}, {transform_indices = @transform_4, window_bounds = array<i64: 8, 8>}, {pipeline_mode = #tpu.pipeline_mode<synchronous>, transform_indices = @transform_5, window_bounds = array<i64: 64, 512>}, {pipeline_mode = #tpu.pipeline_mode<synchronous>, transform_indices = @transform_6, window_bounds = array<i64: 1, 512>}, {pipeline_mode = #tpu.pipeline_mode<synchronous>, transform_indices = @transform_7, window_bounds = array<i64: 32, 32>}, {pipeline_mode = #tpu.pipeline_mode<synchronous>, transform_indices = @transform_8, window_bounds = array<i64: 1, 32>}, {pipeline_mode = #tpu.pipeline_mode<synchronous>, transform_indices = @transform_9, window_bounds = array<i64: 1, 32>}, {transform_indices = @transform_10, window_bounds = array<i64: 8, 8>}, {transform_indices = @transform_11, window_bounds = array<i64: 8, 64>}]} {
    %c0 = arith.constant 0 : index
    %c0_0 = arith.constant 0 : index
    %0 = vector.load %arg1[%c0, %c0_0] : memref<8x96xf32, #tpu.memory_space<vmem>>, vector<8x96xf32>
    %1 = vector.extract_strided_slice %0 {offsets = [0, 0], sizes = [8, 64], strides = [1, 1]} : vector<8x96xf32> to vector<8x64xf32>
    %2 = vector.extract_strided_slice %0 {offsets = [0, 64], sizes = [8, 32], strides = [1, 1]} : vector<8x96xf32> to vector<8x32xf32>
    %c0_1 = arith.constant 0 : index
    %c0_2 = arith.constant 0 : index
    %3 = vector.load %arg6[%c0_1, %c0_2] : memref<64x512xf32, #tpu.memory_space<vmem>>, vector<64x512xf32>
    %cst = arith.constant dense<0.000000e+00> : vector<8x512xf32>
    %4 = tpu.matmul %1, %3, %cst {dimension_numbers = #tpu.dot_dimension_numbers<[1], [0], [0], [1], [0, 0, 1, 1], [], []>} : vector<8x64xf32>, vector<64x512xf32>, vector<8x512xf32> -> vector<8x512xf32>
    %c0_3 = arith.constant 0 : index
    %c0_4 = arith.constant 0 : index
    %5 = vector.load %arg7[%c0_3, %c0_4] : memref<1x512xf32, #tpu.memory_space<vmem>>, vector<1x512xf32>
    %6 = vector.broadcast %5 : vector<1x512xf32> to vector<8x512xf32>
    %7 = arith.addf %4, %6 : vector<8x512xf32>
    %8 = vector.extract_strided_slice %7 {offsets = [0, 0], sizes = [8, 32], strides = [1, 1]} : vector<8x512xf32> to vector<8x32xf32>
    %9 = arith.negf %8 : vector<8x32xf32>
    %10 = math.exp %9 : vector<8x32xf32>
    %cst_5 = arith.constant 1.000000e+00 : f32
    %11 = vector.broadcast %cst_5 : f32 to vector<8x32xf32>
    %12 = arith.addf %11, %10 : vector<8x32xf32>
    %13 = arith.divf %11, %12 : vector<8x32xf32>
    %14 = vector.extract_strided_slice %7 {offsets = [0, 128], sizes = [8, 32], strides = [1, 1]} : vector<8x512xf32> to vector<8x32xf32>
    %15 = arith.negf %14 : vector<8x32xf32>
    %16 = math.exp %15 : vector<8x32xf32>
    %cst_6 = arith.constant 1.000000e+00 : f32
    %17 = vector.broadcast %cst_6 : f32 to vector<8x32xf32>
    %18 = arith.addf %17, %16 : vector<8x32xf32>
    %19 = arith.divf %17, %18 : vector<8x32xf32>
    %20 = vector.extract_strided_slice %7 {offsets = [0, 256], sizes = [8, 32], strides = [1, 1]} : vector<8x512xf32> to vector<8x32xf32>
    %21 = math.tanh %20 : vector<8x32xf32>
    %22 = vector.extract_strided_slice %7 {offsets = [0, 384], sizes = [8, 32], strides = [1, 1]} : vector<8x512xf32> to vector<8x32xf32>
    %23 = arith.negf %22 : vector<8x32xf32>
    %24 = math.exp %23 : vector<8x32xf32>
    %cst_7 = arith.constant 1.000000e+00 : f32
    %25 = vector.broadcast %cst_7 : f32 to vector<8x32xf32>
    %26 = arith.addf %25, %24 : vector<8x32xf32>
    %27 = arith.divf %25, %26 : vector<8x32xf32>
    %28 = arith.mulf %19, %2 : vector<8x32xf32>
    %29 = arith.mulf %13, %21 : vector<8x32xf32>
    %30 = arith.addf %28, %29 : vector<8x32xf32>
    %31 = math.tanh %30 : vector<8x32xf32>
    %32 = arith.mulf %27, %31 : vector<8x32xf32>
    %33 = tpu.concatenate %32, %30 in 1 : vector<8x32xf32>, vector<8x32xf32> -> vector<8x64xf32>
    %c0_8 = arith.constant 0 : index
    %c0_9 = arith.constant 0 : index
    %34 = vector.load %arg12[%c0_8, %c0_9] : memref<8x64xf32, #tpu.memory_space<vmem>>, vector<8x64xf32>
    tpu.vector_store %arg12[%c0_8, %c0_9], %33 {strides = array<i32>} : memref<8x64xf32, #tpu.memory_space<vmem>>, vector<8x64xf32>,
    %c0_10 = arith.constant 0 : index
    %c0_11 = arith.constant 0 : index
    %c0_12 = arith.constant 0 : index
    %35 = vector.load %arg3[%c0_10, %c0_11, %c0_12] : memref<8x8x32xf32, #tpu.memory_space<vmem>>, vector<8x8x32xf32>
    %c0_13 = arith.constant 0 : index
    %c0_14 = arith.constant 0 : index
    %c0_15 = arith.constant 0 : index
    %36 = vector.load %arg2[%c0_13, %c0_14, %c0_15] : memref<8x8x32xf32, #tpu.memory_space<vmem>>, vector<8x8x32xf32>
    %c0_16 = arith.constant 0 : index
    %c0_17 = arith.constant 0 : index
    %37 = vector.load %arg8[%c0_16, %c0_17] : memref<32x32xf32, #tpu.memory_space<vmem>>, vector<32x32xf32>
    %c0_18 = arith.constant 0 : index
    %c0_19 = arith.constant 0 : index
    %38 = vector.load %arg9[%c0_18, %c0_19] : memref<1x32xf32, #tpu.memory_space<vmem>>, vector<1x32xf32>
    %c0_20 = arith.constant 0 : index
    %c0_21 = arith.constant 0 : index
    %39 = vector.load %arg10[%c0_20, %c0_21] : memref<1x32xf32, #tpu.memory_space<vmem>>, vector<1x32xf32>
    %40 = vector.shape_cast %39 : vector<1x32xf32> to vector<1x1x32xf32>
    %c0_22 = arith.constant 0 : index
    %c0_23 = arith.constant 0 : index
    %41 = vector.load %arg4[%c0_22, %c0_23] : memref<8x8xf32, #tpu.memory_space<vmem>>, vector<8x8xf32>
    %cst_24 = arith.constant dense<0.000000e+00> : vector<8x32xf32>
    %42 = tpu.matmul %32, %37, %cst_24 {dimension_numbers = #tpu.dot_dimension_numbers<[1], [0], [0], [1], [0, 0, 1, 1], [], []>} : vector<8x32xf32>, vector<32x32xf32>, vector<8x32xf32> -> vector<8x32xf32>
    %43 = vector.broadcast %38 : vector<1x32xf32> to vector<8x32xf32>
    %44 = arith.addf %42, %43 : vector<8x32xf32>
    %45 = vector.shape_cast %44 : vector<8x32xf32> to vector<8x1x32xf32>
    %46 = vector.broadcast %45 : vector<8x1x32xf32> to vector<8x8x32xf32>
    %47 = arith.addf %35, %46 : vector<8x8x32xf32>
    %48 = math.tanh %47 : vector<8x8x32xf32>
    %49 = vector.broadcast %40 : vector<1x1x32xf32> to vector<8x8x32xf32>
    %50 = arith.mulf %48, %49 : vector<8x8x32xf32>
    %cst_25 = arith.constant dense<0.000000e+00> : vector<8x8xf32>
    %51 = vector.multi_reduction <add>, %50, %cst_25 [2] : vector<8x8x32xf32> to vector<8x8xf32>
    %52 = arith.addf %51, %41 : vector<8x8xf32>
    %cst_26 = arith.constant dense<0xFF800000> : vector<8xf32>
    %53 = vector.multi_reduction <maximumf>, %52, %cst_26 [1] : vector<8x8xf32> to vector<8xf32>
    %54 = vector.shape_cast %53 : vector<8xf32> to vector<8x1xf32>
    %55 = vector.broadcast %54 : vector<8x1xf32> to vector<8x8xf32>
    %56 = arith.subf %52, %55 : vector<8x8xf32>
    %57 = math.exp %56 : vector<8x8xf32>
    %cst_27 = arith.constant dense<0.000000e+00> : vector<8xf32>
    %58 = vector.multi_reduction <add>, %57, %cst_27 [1] : vector<8x8xf32> to vector<8xf32>
    %59 = vector.shape_cast %58 : vector<8xf32> to vector<8x1xf32>
    %60 = tpu.reciprocal %59 {approx = true} : vector<8x1xf32> -> vector<8x1xf32>
    %61 = vector.broadcast %60 : vector<8x1xf32> to vector<8x8xf32>
    %62 = arith.mulf %57, %61 : vector<8x8xf32>
    %63 = vector.shape_cast %62 : vector<8x8xf32> to vector<8x8x1xf32>
    %64 = vector.broadcast %63 : vector<8x8x1xf32> to vector<8x8x32xf32>
    %65 = arith.mulf %64, %36 : vector<8x8x32xf32>
    %cst_28 = arith.constant dense<0.000000e+00> : vector<8x32xf32>
    %66 = vector.multi_reduction <add>, %65, %cst_28 [1] : vector<8x8x32xf32> to vector<8x32xf32>
    %cst_29 = arith.constant dense<0.000000e+00> : vector<8x32xf32>
    %67 = tpu.matmul %66, %37, %cst_29 {dimension_numbers = #tpu.dot_dimension_numbers<[1], [0], [0], [1], [0, 0, 1, 1], [], []>} : vector<8x32xf32>, vector<32x32xf32>, vector<8x32xf32> -> vector<8x32xf32>
    %68 = vector.broadcast %38 : vector<1x32xf32> to vector<8x32xf32>
    %69 = arith.addf %67, %68 : vector<8x32xf32>
    %70 = vector.shape_cast %69 : vector<8x32xf32> to vector<8x1x32xf32>
    %71 = vector.broadcast %70 : vector<8x1x32xf32> to vector<8x8x32xf32>
    %72 = arith.addf %35, %71 : vector<8x8x32xf32>
    %73 = math.tanh %72 : vector<8x8x32xf32>
    %74 = vector.broadcast %40 : vector<1x1x32xf32> to vector<8x8x32xf32>
    %75 = arith.mulf %73, %74 : vector<8x8x32xf32>
    %cst_30 = arith.constant dense<0.000000e+00> : vector<8x8xf32>
    %76 = vector.multi_reduction <add>, %75, %cst_30 [2] : vector<8x8x32xf32> to vector<8x8xf32>
    %c0_31 = arith.constant 0 : index
    %c0_32 = arith.constant 0 : index
    %77 = vector.load %arg5[%c0_31, %c0_32] : memref<8x8xf32, #tpu.memory_space<vmem>>, vector<8x8xf32>
    %78 = arith.addf %76, %77 : vector<8x8xf32>
    %c0_33 = arith.constant 0 : index
    %c0_34 = arith.constant 0 : index
    %79 = vector.load %arg11[%c0_33, %c0_34] : memref<8x8xf32, #tpu.memory_space<vmem>>, vector<8x8xf32>
    tpu.vector_store %arg11[%c0_33, %c0_34], %78 {strides = array<i32>} : memref<8x8xf32, #tpu.memory_space<vmem>>, vector<8x8xf32>,
    return
  }
  func.func @transform_0(%arg0: i32) -> (i32, i32) {
    %c0_i32 = arith.constant 0 : i32
    %c0_i32_0 = arith.constant 0 : i32
    return %arg0, %c0_i32 : i32, i32
  }
  func.func @transform_1(%arg0: i32) -> (i32, i32, i32) {
    %c0_i32 = arith.constant 0 : i32
    %c0_i32_0 = arith.constant 0 : i32
    %c0_i32_1 = arith.constant 0 : i32
    return %arg0, %c0_i32, %c0_i32_0 : i32, i32, i32
  }
  func.func @transform_2(%arg0: i32) -> (i32, i32, i32) {
    %c0_i32 = arith.constant 0 : i32
    %c0_i32_0 = arith.constant 0 : i32
    %c0_i32_1 = arith.constant 0 : i32
    return %arg0, %c0_i32, %c0_i32_0 : i32, i32, i32
  }
  func.func @transform_3(%arg0: i32) -> (i32, i32) {
    %c0_i32 = arith.constant 0 : i32
    %c0_i32_0 = arith.constant 0 : i32
    return %arg0, %c0_i32 : i32, i32
  }
  func.func @transform_4(%arg0: i32) -> (i32, i32) {
    %c0_i32 = arith.constant 0 : i32
    %c0_i32_0 = arith.constant 0 : i32
    return %arg0, %c0_i32 : i32, i32
  }
  func.func @transform_5(%arg0: i32) -> (i32, i32) {
    %c0_i32 = arith.constant 0 : i32
    %c0_i32_0 = arith.constant 0 : i32
    %c0_i32_1 = arith.constant 0 : i32
    return %c0_i32, %c0_i32_0 : i32, i32
  }
  func.func @transform_6(%arg0: i32) -> (i32, i32) {
    %c0_i32 = arith.constant 0 : i32
    %c0_i32_0 = arith.constant 0 : i32
    %c0_i32_1 = arith.constant 0 : i32
    return %c0_i32, %c0_i32_0 : i32, i32
  }
  func.func @transform_7(%arg0: i32) -> (i32, i32) {
    %c0_i32 = arith.constant 0 : i32
    %c0_i32_0 = arith.constant 0 : i32
    %c0_i32_1 = arith.constant 0 : i32
    return %c0_i32, %c0_i32_0 : i32, i32
  }
  func.func @transform_8(%arg0: i32) -> (i32, i32) {
    %c0_i32 = arith.constant 0 : i32
    %c0_i32_0 = arith.constant 0 : i32
    %c0_i32_1 = arith.constant 0 : i32
    return %c0_i32, %c0_i32_0 : i32, i32
  }
  func.func @transform_9(%arg0: i32) -> (i32, i32) {
    %c0_i32 = arith.constant 0 : i32
    %c0_i32_0 = arith.constant 0 : i32
    %c0_i32_1 = arith.constant 0 : i32
    return %c0_i32, %c0_i32_0 : i32, i32
  }
  func.func @transform_10(%arg0: i32) -> (i32, i32) {
    %c0_i32 = arith.constant 0 : i32
    %c0_i32_0 = arith.constant 0 : i32
    return %arg0, %c0_i32 : i32, i32
  }
  func.func @transform_11(%arg0: i32) -> (i32, i32) {
    %c0_i32 = arith.constant 0 : i32
    %c0_i32_0 = arith.constant 0 : i32
    return %arg0, %c0_i32 : i32, i32
  }
}

</mosaic_0001>

<llo_original>
// kernel: tpu_custom_call.1
$region0: #{tpu_custom_call.1}
  #allocation0 [shape = 'u32[]', space=smem, size = 0x4, offset = 0x4, fixed_abs, tag = 'smem constant byte address 0x4 - core index']
  #allocation1 [shape = 'u32[144,128]{1,0:T(1,128)}', space=vmem, size = 0x12000, scoped, tag = 'internal scratch']
  %s0 = inlined_call_operand.hbm [shape: f32[8,96], index: 0, kind: input, shape index: {}]
  %s1 = inlined_call_operand.hbm [shape: f32[8,8,32], index: 1, kind: input, shape index: {}]
  %s2 = inlined_call_operand.hbm [shape: f32[8,8,32], index: 2, kind: input, shape index: {}]
  %s3 = inlined_call_operand.hbm [shape: f32[8,8], index: 3, kind: input, shape index: {}]
  %s4 = inlined_call_operand.hbm [shape: f32[8,8], index: 4, kind: input, shape index: {}]
  %s5 = inlined_call_operand.hbm [shape: f32[64,512], index: 5, kind: input, shape index: {}]
  %s6 = inlined_call_operand.vmem [shape: f32[1,512], index: 6, kind: input, shape index: {}]
  %s7 = inlined_call_operand.hbm [shape: f32[32,32], index: 7, kind: input, shape index: {}]
  %s8 = inlined_call_operand.vmem [shape: f32[1,32], index: 8, kind: input, shape index: {}]
  %s9 = inlined_call_operand.vmem [shape: f32[1,32], index: 9, kind: input, shape index: {}]
  %s10 = inlined_call_operand.hbm [shape: f32[8,8], index: 10, kind: output, shape index: {0}]
  %s11 = inlined_call_operand.hbm [shape: f32[8,64], index: 11, kind: output, shape index: {1}]
  %12 = xla_tuple %s10, %s11
  %s13 = sld [smem:[#allocation0]]
  $region86: #{tpu_custom_call.1} parent=0
    _
  %s15 = ssub.s32 1, %s13
  %s16 = scalar_select 0, %s15, %s13
  $region1: #{tpu_custom_call.1} parent=0
    #allocation2 [shape = 'u8[4096]{0}', space=vmem, size = 0x1000, scoped, tag = 'input window, operand 0, single buffered']
    #allocation3 [shape = 's32[1]{0}', space=sflag, size = 0x4, scoped, tag = 'scoped memory for tpu_custom_call.1']
    #allocation4 [shape = 's32[1]{0}', space=sflag, size = 0x4, scoped, tag = 'scoped memory for tpu_custom_call.1']
    #allocation5 [shape = 'u8[32768]{0}', space=vmem, size = 0x8000, scoped, tag = 'input window, operand 1, single buffered']
    #allocation6 [shape = 's32[1]{0}', space=sflag, size = 0x4, scoped, tag = 'scoped memory for tpu_custom_call.1']
    #allocation7 [shape = 'u8[32768]{0}', space=vmem, size = 0x8000, scoped, tag = 'input window, operand 2, single buffered']
    #allocation8 [shape = 'u8[4096]{0}', space=vmem, size = 0x1000, scoped, tag = 'input window, operand 3, single buffered']
    #allocation9 [shape = 's32[1]{0}', space=sflag, size = 0x4, scoped, tag = 'scoped memory for tpu_custom_call.1']
    #allocation10 [shape = 'u8[4096]{0}', space=vmem, size = 0x1000, scoped, tag = 'input window, operand 4, single buffered']
    #allocation11 [shape = 'u8[131072]{0}', space=vmem, size = 0x20000, scoped, tag = 'input window, operand 5, single buffered']
    #allocation12 [shape = 's32[1]{0}', space=sflag, size = 0x4, scoped, tag = 'scoped memory for tpu_custom_call.1']
    #allocation13 [shape = 'u8[16384]{0}', space=vmem, size = 0x4000, scoped, tag = 'input window, operand 7, single buffered']
    #allocation14 [shape = 'u8[4096]{0}', space=vmem, size = 0x1000, scoped, tag = 'output window, operand 0, single buffered']
    #allocation15 [shape = 'u8[4096]{0}', space=vmem, size = 0x1000, scoped, tag = 'output window, operand 1, single buffered']
    #allocation16 [shape = 's32[1]{0}', space=sflag, size = 0x4, scoped, tag = 'scoped memory for tpu_custom_call.1']
    %17 = vsyncpa [#allocation3], 0
    %18 = vsyncpa [#allocation6], 0
    %19 = vsyncpa [#allocation9], 0
    %20 = vsyncpa [#allocation12], 0
    %21 = vsyncpa [#allocation4], 0
    %22 = vsyncpa [#allocation16], 0
    // Predicated region
    $region2: #{tpu_custom_call.1} parent=1 // pred_check
      _
    $region3: #{tpu_custom_call.1} parent=1 // pred_check_branch
      %24 = sbr.rel (0) target = $region5
    $region4: #{tpu_custom_call.1} parent=1 // pred_region
      %s26 = ssub.s32 128, 128
      %27 = vsyncadd [#allocation3], %s26
      %s29 = sshll.u32 [#allocation2], 4
      %s30 = int_to_ptr.vmem [resolvable:$true] %s29
      %32 = dma.hbm_to_vmem [thread:$0]  %s0, 128, %s30, [#allocation3]
    $region5: #{tpu_custom_call.1} parent=1 // pred_fallthru
      _
    // Predicated region
    $region6: #{tpu_custom_call.1} parent=1 // pred_check
      _
    $region7: #{tpu_custom_call.1} parent=1 // pred_check_branch
      %34 = sbr.rel (0) target = $region9
    $region8: #{tpu_custom_call.1} parent=1 // pred_region
      %s36 = ssub.s32 1024, 1024
      %37 = vsyncadd [#allocation6], %s36
      %s38 = sshll.u32 [#allocation5], 4
      %s39 = int_to_ptr.vmem [resolvable:$true] %s38
      %44 = dma.hbm_to_vmem [thread:$0]  %s1, 1024, %s39, [#allocation6], 128, 128, 8
    $region9: #{tpu_custom_call.1} parent=1 // pred_fallthru
      _
    // Predicated region
    $region10: #{tpu_custom_call.1} parent=1 // pred_check
      _
    $region11: #{tpu_custom_call.1} parent=1 // pred_check_branch
      %46 = sbr.rel (0) target = $region13
    $region12: #{tpu_custom_call.1} parent=1 // pred_region
      %s48 = ssub.s32 1024, 1024
      %49 = vsyncadd [#allocation6], %s48
      %s50 = sshll.u32 [#allocation7], 4
      %s51 = int_to_ptr.vmem [resolvable:$true] %s50
      %56 = dma.hbm_to_vmem [thread:$0]  %s2, 1024, %s51, [#allocation6], 128, 128, 8
    $region13: #{tpu_custom_call.1} parent=1 // pred_fallthru
      _
    // Predicated region
    $region14: #{tpu_custom_call.1} parent=1 // pred_check
      _
    $region15: #{tpu_custom_call.1} parent=1 // pred_check_branch
      %58 = sbr.rel (0) target = $region17
    $region16: #{tpu_custom_call.1} parent=1 // pred_region
      %s60 = ssub.s32 128, 128
      %61 = vsyncadd [#allocation9], %s60
      %s63 = sshll.u32 [#allocation8], 4
      %s64 = int_to_ptr.vmem [resolvable:$true] %s63
      %66 = dma.hbm_to_vmem [thread:$0]  %s3, 128, %s64, [#allocation9]
    $region17: #{tpu_custom_call.1} parent=1 // pred_fallthru
      _
    // Predicated region
    $region18: #{tpu_custom_call.1} parent=1 // pred_check
      _
    $region19: #{tpu_custom_call.1} parent=1 // pred_check_branch
      %68 = sbr.rel (0) target = $region21
    $region20: #{tpu_custom_call.1} parent=1 // pred_region
      %s70 = ssub.s32 128, 128
      %71 = vsyncadd [#allocation9], %s70
      %s73 = sshll.u32 [#allocation10], 4
      %s74 = int_to_ptr.vmem [resolvable:$true] %s73
      %76 = dma.hbm_to_vmem [thread:$0]  %s4, 128, %s74, [#allocation9]
    $region21: #{tpu_custom_call.1} parent=1 // pred_fallthru
      _
    // Predicated region
    $region22: #{tpu_custom_call.1} parent=1 // pred_check
      _
    $region23: #{tpu_custom_call.1} parent=1 // pred_check_branch
      %78 = sbr.rel (0) target = $region25
    $region24: #{tpu_custom_call.1} parent=1 // pred_region
      %s80 = ssub.s32 4096, 4096
      %81 = vsyncadd [#allocation12], %s80
      %s82 = sshll.u32 [#allocation11], 4
      %s83 = int_to_ptr.vmem [resolvable:$true] %s82
      %88 = dma.hbm_to_vmem [thread:$0]  %s5, 4096, %s83, [#allocation12], 512, 512, 32
    $region25: #{tpu_custom_call.1} parent=1 // pred_fallthru
      _
    // Predicated region
    $region26: #{tpu_custom_call.1} parent=1 // pred_check
      _
    $region27: #{tpu_custom_call.1} parent=1 // pred_check_branch
      %90 = sbr.rel (0) target = $region29
    $region28: #{tpu_custom_call.1} parent=1 // pred_region
      _
    $region29: #{tpu_custom_call.1} parent=1 // pred_fallthru
      _
    // Predicated region
    $region30: #{tpu_custom_call.1} parent=1 // pred_check
      _
    $region31: #{tpu_custom_call.1} parent=1 // pred_check_branch
      %92 = sbr.rel (0) target = $region33
    $region32: #{tpu_custom_call.1} parent=1 // pred_region
      %s94 = ssub.s32 512, 512
      %95 = vsyncadd [#allocation12], %s94
      %s96 = sshll.u32 [#allocation13], 4
      %s97 = int_to_ptr.vmem [resolvable:$true] %s96
      %102 = dma.hbm_to_vmem [thread:$0]  %s7, 512, %s97, [#allocation12], 128, 128, 8
    $region33: #{tpu_custom_call.1} parent=1 // pred_fallthru
      _
    // Predicated region
    $region34: #{tpu_custom_call.1} parent=1 // pred_check
      _
    $region35: #{tpu_custom_call.1} parent=1 // pred_check_branch
      %104 = sbr.rel (0) target = $region37
    $region36: #{tpu_custom_call.1} parent=1 // pred_region
      _
    $region37: #{tpu_custom_call.1} parent=1 // pred_fallthru
      _
    // Predicated region
    $region38: #{tpu_custom_call.1} parent=1 // pred_check
      _
    $region39: #{tpu_custom_call.1} parent=1 // pred_check_branch
      %106 = sbr.rel (0) target = $region41
    $region40: #{tpu_custom_call.1} parent=1 // pred_region
      _
    $region41: #{tpu_custom_call.1} parent=1 // pred_fallthru
      _
    // Predicated region
    $region42: #{tpu_custom_call.1} parent=1 // pred_check
      _
    $region43: #{tpu_custom_call.1} parent=1 // pred_check_branch
      %108 = sbr.rel (0) target = $region45
    $region44: #{tpu_custom_call.1} parent=1 // pred_region
      %109 = dma.done [#allocation3], 128
    $region45: #{tpu_custom_call.1} parent=1 // pred_fallthru
      _
    // Predicated region
    $region46: #{tpu_custom_call.1} parent=1 // pred_check
      _
    $region47: #{tpu_custom_call.1} parent=1 // pred_check_branch
      %111 = sbr.rel (0) target = $region49
    $region48: #{tpu_custom_call.1} parent=1 // pred_region
      %112 = dma.done [#allocation6], 1024
    $region49: #{tpu_custom_call.1} parent=1 // pred_fallthru
      _
    // Predicated region
    $region50: #{tpu_custom_call.1} parent=1 // pred_check
      _
    $region51: #{tpu_custom_call.1} parent=1 // pred_check_branch
      %114 = sbr.rel (0) target = $region53
    $region52: #{tpu_custom_call.1} parent=1 // pred_region
      %115 = dma.done [#allocation6], 1024
    $region53: #{tpu_custom_call.1} parent=1 // pred_fallthru
      _
    // Predicated region
    $region54: #{tpu_custom_call.1} parent=1 // pred_check
      _
    $region55: #{tpu_custom_call.1} parent=1 // pred_check_branch
      %117 = sbr.rel (0) target = $region57
    $region56: #{tpu_custom_call.1} parent=1 // pred_region
      %118 = dma.done [#allocation9], 128
    $region57: #{tpu_custom_call.1} parent=1 // pred_fallthru
      _
    // Predicated region
    $region58: #{tpu_custom_call.1} parent=1 // pred_check
      _
    $region59: #{tpu_custom_call.1} parent=1 // pred_check_branch
      %120 = sbr.rel (0) target = $region61
    $region60: #{tpu_custom_call.1} parent=1 // pred_region
      %121 = dma.done [#allocation9], 128
    $region61: #{tpu_custom_call.1} parent=1 // pred_fallthru
      _
    // Predicated region
    $region62: #{tpu_custom_call.1} parent=1 // pred_check
      _
    $region63: #{tpu_custom_call.1} parent=1 // pred_check_branch
      %123 = sbr.rel (0) target = $region65
    $region64: #{tpu_custom_call.1} parent=1 // pred_region
      %124 = dma.done [#allocation12], 4096
    $region65: #{tpu_custom_call.1} parent=1 // pred_fallthru
      _
    // Predicated region
    $region66: #{tpu_custom_call.1} parent=1 // pred_check
      _
    $region67: #{tpu_custom_call.1} parent=1 // pred_check_branch
      %126 = sbr.rel (0) target = $region69
    $region68: #{tpu_custom_call.1} parent=1 // pred_region
      %127 = dma.done [#allocation12], 512
    $region69: #{tpu_custom_call.1} parent=1 // pred_fallthru
      _
    %v128 = vld [vmem:[#allocation2] sm:$0xff]
    %v129 = vld [vmem:[#allocation11] sm:$0xff]
    %v130 = vld [vmem:[#allocation11 + $0x8] sm:$0xff]
    %v131 = vld [vmem:[#allocation11 + $0x10] sm:$0xff]
    %v132 = vld [vmem:[#allocation11 + $0x18] sm:$0xff]
    %v133 = vld [vmem:[#allocation11 + $0x20] sm:$0xff]
    %v134 = vld [vmem:[#allocation11 + $0x28] sm:$0xff]
    %v135 = vld [vmem:[#allocation11 + $0x30] sm:$0xff]
    %v136 = vld [vmem:[#allocation11 + $0x38] sm:$0xff]
    %v137 = vld [vmem:[#allocation11 + $0x40] sm:$0xff]
    %v138 = vld [vmem:[#allocation11 + $0x48] sm:$0xff]
    %v139 = vld [vmem:[#allocation11 + $0x50] sm:$0xff]
    %v140 = vld [vmem:[#allocation11 + $0x58] sm:$0xff]
    %v141 = vld [vmem:[#allocation11 + $0x60] sm:$0xff]
    %v142 = vld [vmem:[#allocation11 + $0x68] sm:$0xff]
    %v143 = vld [vmem:[#allocation11 + $0x70] sm:$0xff]
    %v144 = vld [vmem:[#allocation11 + $0x78] sm:$0xff]
    %v145 = vld [vmem:[#allocation11 + $0x80] sm:$0xff]
    %v146 = vld [vmem:[#allocation11 + $0x88] sm:$0xff]
    %v147 = vld [vmem:[#allocation11 + $0x90] sm:$0xff]
    %v148 = vld [vmem:[#allocation11 + $0x98] sm:$0xff]
    %v149 = vld [vmem:[#allocation11 + $0xa0] sm:$0xff]
    %v150 = vld [vmem:[#allocation11 + $0xa8] sm:$0xff]
    %v151 = vld [vmem:[#allocation11 + $0xb0] sm:$0xff]
    %v152 = vld [vmem:[#allocation11 + $0xb8] sm:$0xff]
    %v153 = vld [vmem:[#allocation11 + $0xc0] sm:$0xff]
    %v154 = vld [vmem:[#allocation11 + $0xc8] sm:$0xff]
    %v155 = vld [vmem:[#allocation11 + $0xd0] sm:$0xff]
    %v156 = vld [vmem:[#allocation11 + $0xd8] sm:$0xff]
    %v157 = vld [vmem:[#allocation11 + $0xe0] sm:$0xff]
    %v158 = vld [vmem:[#allocation11 + $0xe8] sm:$0xff]
    %v159 = vld [vmem:[#allocation11 + $0xf0] sm:$0xff]
    %v160 = vld [vmem:[#allocation11 + $0xf8] sm:$0xff]
    %v161 = vld [vmem:[%s6] sm:$0xf]
    %v163 = vlaneseq
    %v164 = vshrl.u32 %v163, 7
    %v165 = vsub.s32 0, %v164
    %v166 = vrot.slane %v161, %v165
    %v167 = vlaneseq
    %v168 = vshrl.u32 %v167, 7
    %v169 = vsub.s32 1, %v168
    %v170 = vrot.slane %v161, %v169
    %v171 = vlaneseq
    %v172 = vshrl.u32 %v171, 7
    %v173 = vsub.s32 2, %v172
    %v174 = vrot.slane %v161, %v173
    %v175 = vlaneseq
    %v176 = vshrl.u32 %v175, 7
    %v177 = vsub.s32 3, %v176
    %v178 = vrot.slane %v161, %v177
    %vm183 = vcmask 523264
    %v185 = vsel %vm183, %v128, 0
    %187 = vmatprep.subr.mxu0 0.0
    %188 = vmatpush1.msra.mxu0 0.0
    %189 = vmatprep.subr.mxu0 0.0
    %190 = vmatpush1.msra.mxu0 0.0
    %191 = vmatprep.subr.mxu0 0.0
    %192 = vmatpush1.msra.mxu0 0.0
    %193 = vmatprep.subr.mxu0 0.0
    %194 = vmatpush1.msra.mxu0 0.0
    %195 = vmatprep.subr.mxu0 0.0
    %196 = vmatpush1.msra.mxu0 0.0
    %197 = vmatprep.subr.mxu0 0.0
    %198 = vmatpush1.msra.mxu0 0.0
    %199 = vmatprep.subr.mxu0 0.0
    %200 = vmatpush1.msra.mxu0 0.0
    %201 = vmatprep.subr.mxu0 0.0
    %202 = vmatpush1.msra.mxu0 0.0
    %203 = vmatprep.subr.mxu0 %v158
    %204 = vmatpush1.msra.mxu0 %v157
    %205 = vmatprep.subr.mxu0 %v154
    %206 = vmatpush1.msra.mxu0 %v153
    %207 = vmatprep.subr.mxu0 %v150
    %208 = vmatpush1.msra.mxu0 %v149
    %209 = vmatprep.subr.mxu0 %v146
    %210 = vmatpush1.msra.mxu0 %v145
    %211 = vmatprep.subr.mxu0 %v142
    %212 = vmatpush1.msra.mxu0 %v141
    %213 = vmatprep.subr.mxu0 %v138
    %214 = vmatpush1.msra.mxu0 %v137
    %215 = vmatprep.subr.mxu0 %v134
    %216 = vmatpush1.msra.mxu0 %v133
    %217 = vmatprep.subr.mxu0 %v130
    %218 = vmatpush1.msra.mxu0 %v129
    %219 = vmatprep.subr.mxu0 0.0
    %220 = vmatpush2.msra.mxu0 0.0
    %221 = vmatprep.subr.mxu0 0.0
    %222 = vmatpush2.msra.mxu0 0.0
    %223 = vmatprep.subr.mxu0 0.0
    %224 = vmatpush2.msra.mxu0 0.0
    %225 = vmatprep.subr.mxu0 0.0
    %226 = vmatpush2.msra.mxu0 0.0
    %227 = vmatprep.subr.mxu0 0.0
    %228 = vmatpush2.msra.mxu0 0.0
    %229 = vmatprep.subr.mxu0 0.0
    %230 = vmatpush2.msra.mxu0 0.0
    %231 = vmatprep.subr.mxu0 0.0
    %232 = vmatpush2.msra.mxu0 0.0
    %233 = vmatprep.subr.mxu0 0.0
    %234 = vmatpush2.msra.mxu0 0.0
    %235 = vmatprep.subr.mxu0 0.0
    %236 = vmatpush2.msra.mxu0 0.0
    %237 = vmatprep.subr.mxu0 0.0
    %238 = vmatpush2.msra.mxu0 0.0
    %239 = vmatprep.subr.mxu0 0.0
    %240 = vmatpush2.msra.mxu0 0.0
    %241 = vmatprep.subr.mxu0 0.0
    %242 = vmatpush2.msra.mxu0 0.0
    %243 = vmatprep.subr.mxu0 0.0
    %244 = vmatpush2.msra.mxu0 0.0
    %245 = vmatprep.subr.mxu0 0.0
    %246 = vmatpush2.msra.mxu0 0.0
    %247 = vmatprep.subr.mxu0 0.0
    %248 = vmatpush2.msra.mxu0 0.0
    %249 = vmatprep.subr.mxu0 0.0
    %250 = vmatpush2.msra.mxu0 0.0
    %251 = vmatprep.mubr.f32.mxu0 0.0
    %252 = vmatmul.mubr.f32.gmra.mxu0 %v185
    %v253 = vpop.f32.mrf.mxu0
    %v254 = vadd.f32 %v166, %v253
    %v255 = vpop.f32.mrf.mxu0
    %v256 = vadd.f32 %v170, %v255
    %257 = vdwg.mxu0
    %258 = vmatprep.subr.mxu0 0.0
    %259 = vmatpush1.msra.mxu0 0.0
    %260 = vmatprep.subr.mxu0 0.0
    %261 = vmatpush1.msra.mxu0 0.0
    %262 = vmatprep.subr.mxu0 0.0
    %263 = vmatpush1.msra.mxu0 0.0
    %264 = vmatprep.subr.mxu0 0.0
    %265 = vmatpush1.msra.mxu0 0.0
    %266 = vmatprep.subr.mxu0 0.0
    %267 = vmatpush1.msra.mxu0 0.0
    %268 = vmatprep.subr.mxu0 0.0
    %269 = vmatpush1.msra.mxu0 0.0
    %270 = vmatprep.subr.mxu0 0.0
    %271 = vmatpush1.msra.mxu0 0.0
    %272 = vmatprep.subr.mxu0 0.0
    %273 = vmatpush1.msra.mxu0 0.0
    %274 = vmatprep.subr.mxu0 %v160
    %275 = vmatpush1.msra.mxu0 %v159
    %276 = vmatprep.subr.mxu0 %v156
    %277 = vmatpush1.msra.mxu0 %v155
    %278 = vmatprep.subr.mxu0 %v152
    %279 = vmatpush1.msra.mxu0 %v151
    %280 = vmatprep.subr.mxu0 %v148
    %281 = vmatpush1.msra.mxu0 %v147
    %282 = vmatprep.subr.mxu0 %v144
    %283 = vmatpush1.msra.mxu0 %v143
    %284 = vmatprep.subr.mxu0 %v140
    %285 = vmatpush1.msra.mxu0 %v139
    %286 = vmatprep.subr.mxu0 %v136
    %287 = vmatpush1.msra.mxu0 %v135
    %288 = vmatprep.subr.mxu0 %v132
    %289 = vmatpush1.msra.mxu0 %v131
    %290 = vmatprep.subr.mxu0 0.0
    %291 = vmatpush2.msra.mxu0 0.0
    %292 = vmatprep.subr.mxu0 0.0
    %293 = vmatpush2.msra.mxu0 0.0
    %294 = vmatprep.subr.mxu0 0.0
    %295 = vmatpush2.msra.mxu0 0.0
    %296 = vmatprep.subr.mxu0 0.0
    %297 = vmatpush2.msra.mxu0 0.0
    %298 = vmatprep.subr.mxu0 0.0
    %299 = vmatpush2.msra.mxu0 0.0
    %300 = vmatprep.subr.mxu0 0.0
    %301 = vmatpush2.msra.mxu0 0.0
    %302 = vmatprep.subr.mxu0 0.0
    %303 = vmatpush2.msra.mxu0 0.0
    %304 = vmatprep.subr.mxu0 0.0
    %305 = vmatpush2.msra.mxu0 0.0
    %306 = vmatprep.subr.mxu0 0.0
    %307 = vmatpush2.msra.mxu0 0.0
    %308 = vmatprep.subr.mxu0 0.0
    %309 = vmatpush2.msra.mxu0 0.0
    %310 = vmatprep.subr.mxu0 0.0
    %311 = vmatpush2.msra.mxu0 0.0
    %312 = vmatprep.subr.mxu0 0.0
    %313 = vmatpush2.msra.mxu0 0.0
    %314 = vmatprep.subr.mxu0 0.0
    %315 = vmatpush2.msra.mxu0 0.0
    %316 = vmatprep.subr.mxu0 0.0
    %317 = vmatpush2.msra.mxu0 0.0
    %318 = vmatprep.subr.mxu0 0.0
    %319 = vmatpush2.msra.mxu0 0.0
    %320 = vmatprep.subr.mxu0 0.0
    %321 = vmatpush2.msra.mxu0 0.0
    %322 = vmatprep.mubr.f32.mxu0 0.0
    %323 = vmatmul.mubr.f32.gmra.mxu0 %v185
    %v324 = vpop.f32.mrf.mxu0
    %v325 = vadd.f32 %v174, %v324
    %v326 = vpop.f32.mrf.mxu0
    %v327 = vadd.f32 %v178, %v326
    %328 = vdwg.mxu0
    %v329 = vxor.u32 %v254, 2147483648
    %v330 = vmul.f32 %v329, 1.442695
    %v331 = vpow.pop %v330
    %v332 = vadd.f32 %v331, 1.0
    %v333 = vrcp.pop %v332
    %v334 = vmul.f32 1.0, %v333
    %v335 = vxor.u32 %v256, 2147483648
    %v336 = vmul.f32 %v335, 1.442695
    %v337 = vpow.pop %v336
    %v338 = vadd.f32 %v337, 1.0
    %v339 = vrcp.pop %v338
    %v340 = vmul.f32 1.0, %v339
    %v341 = vtanh.pop %v325
    %v342 = vxor.u32 %v327, 2147483648
    %v343 = vmul.f32 %v342, 1.442695
    %v344 = vpow.pop %v343
    %v345 = vadd.f32 %v344, 1.0
    %v346 = vrcp.pop %v345
    %v347 = vmul.f32 1.0, %v346
    %348 = vrot.lane.b32.xlu0 %v128, 64
    %v349 = vpop.permute.xlu0 %348
    %v351 = vmul.f32 %v340, %v349
    %v352 = vmul.f32 %v334, %v341
    %v353 = vadd.f32 %v351, %v352
    %v354 = vtanh.pop %v353
    %v355 = vmul.f32 %v347, %v354
    %357 = vrot.lane.b32.xlu0 %v353, 32
    %v358 = vpop.permute.xlu0 %357
    %vm360 = vcmask 261120
    %v361 = vsel %vm360, %v355, %v358
    %362 = vst.msk [vmem:[#allocation15] sm:$0xff] %vm183, %v361
    %v363 = vld [vmem:[#allocation7] sm:$0xff]
    %v364 = vld [vmem:[#allocation7 + $0x8] sm:$0xff]
    %v365 = vld [vmem:[#allocation7 + $0x10] sm:$0xff]
    %v366 = vld [vmem:[#allocation7 + $0x18] sm:$0xff]
    %v367 = vld [vmem:[#allocation7 + $0x20] sm:$0xff]
    %v368 = vld [vmem:[#allocation7 + $0x28] sm:$0xff]
    %v369 = vld [vmem:[#allocation7 + $0x30] sm:$0xff]
    %v370 = vld [vmem:[#allocation7 + $0x38] sm:$0xff]
    %v371 = vld [vmem:[#allocation5] sm:$0xff]
    %v372 = vld [vmem:[#allocation5 + $0x8] sm:$0xff]
    %v373 = vld [vmem:[#allocation5 + $0x10] sm:$0xff]
    %v374 = vld [vmem:[#allocation5 + $0x18] sm:$0xff]
    %v375 = vld [vmem:[#allocation5 + $0x20] sm:$0xff]
    %v376 = vld [vmem:[#allocation5 + $0x28] sm:$0xff]
    %v377 = vld [vmem:[#allocation5 + $0x30] sm:$0xff]
    %v378 = vld [vmem:[#allocation5 + $0x38] sm:$0xff]
    %v379 = vld [vmem:[#allocation13] sm:$0xff]
    %v380 = vld [vmem:[#allocation13 + $0x8] sm:$0xff]
    %v381 = vld [vmem:[#allocation13 + $0x10] sm:$0xff]
    %v382 = vld [vmem:[#allocation13 + $0x18] sm:$0xff]
    %v383 = vld [vmem:[%s8] sm:$0x1]
    %v384 = vld [vmem:[%s9] sm:$0x1]
    %v385 = vld [vmem:[#allocation8] sm:$0xff]
    %v387 = vlaneseq
    %v388 = vshrl.u32 %v387, 7
    %v389 = vsub.s32 0, %v388
    %v390 = vrot.slane %v383, %v389
    %v393 = vsel %vm360, %v355, 0
    %395 = vmatprep.subr.mxu0 0.0
    %396 = vmatpush1.msra.mxu0 0.0
    %397 = vmatprep.subr.mxu0 0.0
    %398 = vmatpush1.msra.mxu0 0.0
    %399 = vmatprep.subr.mxu0 0.0
    %400 = vmatpush1.msra.mxu0 0.0
    %401 = vmatprep.subr.mxu0 0.0
    %402 = vmatpush1.msra.mxu0 0.0
    %403 = vmatprep.subr.mxu0 0.0
    %404 = vmatpush1.msra.mxu0 0.0
    %405 = vmatprep.subr.mxu0 0.0
    %406 = vmatpush1.msra.mxu0 0.0
    %407 = vmatprep.subr.mxu0 0.0
    %408 = vmatpush1.msra.mxu0 0.0
    %409 = vmatprep.subr.mxu0 0.0
    %410 = vmatpush1.msra.mxu0 0.0
    %411 = vmatprep.subr.mxu0 0.0
    %412 = vmatpush1.msra.mxu0 0.0
    %413 = vmatprep.subr.mxu0 0.0
    %414 = vmatpush1.msra.mxu0 0.0
    %415 = vmatprep.subr.mxu0 0.0
    %416 = vmatpush1.msra.mxu0 0.0
    %417 = vmatprep.subr.mxu0 0.0
    %418 = vmatpush1.msra.mxu0 0.0
    %419 = vmatprep.subr.mxu0 0.0
    %420 = vmatpush1.msra.mxu0 %v382
    %421 = vmatprep.subr.mxu0 0.0
    %422 = vmatpush1.msra.mxu0 %v381
    %423 = vmatprep.subr.mxu0 0.0
    %424 = vmatpush1.msra.mxu0 %v380
    %425 = vmatprep.subr.mxu0 0.0
    %426 = vmatpush1.msra.mxu0 %v379
    %427 = vmatprep.subr.mxu0 0.0
    %428 = vmatpush2.msra.mxu0 0.0
    %429 = vmatprep.subr.mxu0 0.0
    %430 = vmatpush2.msra.mxu0 0.0
    %431 = vmatprep.subr.mxu0 0.0
    %432 = vmatpush2.msra.mxu0 0.0
    %433 = vmatprep.subr.mxu0 0.0
    %434 = vmatpush2.msra.mxu0 0.0
    %435 = vmatprep.subr.mxu0 0.0
    %436 = vmatpush2.msra.mxu0 0.0
    %437 = vmatprep.subr.mxu0 0.0
    %438 = vmatpush2.msra.mxu0 0.0
    %439 = vmatprep.subr.mxu0 0.0
    %440 = vmatpush2.msra.mxu0 0.0
    %441 = vmatprep.subr.mxu0 0.0
    %442 = vmatpush2.msra.mxu0 0.0
    %443 = vmatprep.subr.mxu0 0.0
    %444 = vmatpush2.msra.mxu0 0.0
    %445 = vmatprep.subr.mxu0 0.0
    %446 = vmatpush2.msra.mxu0 0.0
    %447 = vmatprep.subr.mxu0 0.0
    %448 = vmatpush2.msra.mxu0 0.0
    %449 = vmatprep.subr.mxu0 0.0
    %450 = vmatpush2.msra.mxu0 0.0
    %451 = vmatprep.subr.mxu0 0.0
    %452 = vmatpush2.msra.mxu0 0.0
    %453 = vmatprep.subr.mxu0 0.0
    %454 = vmatpush2.msra.mxu0 0.0
    %455 = vmatprep.subr.mxu0 0.0
    %456 = vmatpush2.msra.mxu0 0.0
    %457 = vmatprep.subr.mxu0 0.0
    %458 = vmatpush2.msra.mxu0 0.0
    %459 = vmatprep.mubr.f32.mxu0 0.0
    %460 = vmatmul.mubr.f32.gmra.mxu0 %v393
    %v461 = vpop.f32.mrf.mxu0
    %v462 = vadd.f32 %v390, %v461
    %v463 = vpop.f32.mrf.mxu0
    %464 = vdwg.mxu0
    %v466 = vcombine.high %v462, %v462
    %v468 = vunpack.c.l.s4 1966171168
    %v469 = vunpack.c.0.s8 %v468
    %v470 = vlaneseq
    %v471 = vshrl.u32 %v470, 7
    %v472 = vsub.s32 %v469, %v471
    %v473 = vrot.slane %v462, %v472
    %v475 = vunpack.c.l.s4 1966171168
    %v476 = vunpack.c.0.s8 %v475
    %v477 = vlaneseq
    %v478 = vshrl.u32 %v477, 7
    %v479 = vsub.s32 %v476, %v478
    %v480 = vrot.slane %v466, %v479
    %v481 = vcombine.high %v473, %v473
    %v482 = vcombine.high %v480, %v480
    %v484 = vunpack.c.l.s4 1966171168
    %v485 = vunpack.c.0.s8 %v484
    %v486 = vlaneseq
    %v487 = vshrl.u32 %v486, 7
    %v488 = vsub.s32 %v485, %v487
    %v489 = vrot.slane %v473, %v488
    %v491 = vunpack.c.l.s4 1966171168
    %v492 = vunpack.c.0.s8 %v491
    %v493 = vlaneseq
    %v494 = vshrl.u32 %v493, 7
    %v495 = vsub.s32 %v492, %v494
    %v496 = vrot.slane %v480, %v495
    %v498 = vunpack.c.l.s4 1966171168
    %v499 = vunpack.c.0.s8 %v498
    %v500 = vlaneseq
    %v501 = vshrl.u32 %v500, 7
    %v502 = vsub.s32 %v499, %v501
    %v503 = vrot.slane %v481, %v502
    %v505 = vunpack.c.l.s4 1966171168
    %v506 = vunpack.c.0.s8 %v505
    %v507 = vlaneseq
    %v508 = vshrl.u32 %v507, 7
    %v509 = vsub.s32 %v506, %v508
    %v510 = vrot.slane %v482, %v509
    %v511 = vcombine.high %v489, %v489
    %v512 = vcombine.high %v496, %v496
    %v513 = vcombine.high %v503, %v503
    %v514 = vcombine.high %v510, %v510
    %v515 = vlaneseq
    %v516 = vshrl.u32 %v515, 7
    %v517 = vsub.s32 0, %v516
    %v518 = vrot.slane %v489, %v517
    %v519 = vlaneseq
    %v520 = vshrl.u32 %v519, 7
    %v521 = vsub.s32 0, %v520
    %v522 = vrot.slane %v503, %v521
    %v523 = vlaneseq
    %v524 = vshrl.u32 %v523, 7
    %v525 = vsub.s32 0, %v524
    %v526 = vrot.slane %v511, %v525
    %v527 = vlaneseq
    %v528 = vshrl.u32 %v527, 7
    %v529 = vsub.s32 0, %v528
    %v530 = vrot.slane %v513, %v529
    %v531 = vlaneseq
    %v532 = vshrl.u32 %v531, 7
    %v533 = vsub.s32 0, %v532
    %v534 = vrot.slane %v496, %v533
    %v535 = vlaneseq
    %v536 = vshrl.u32 %v535, 7
    %v537 = vsub.s32 0, %v536
    %v538 = vrot.slane %v510, %v537
    %v539 = vlaneseq
    %v540 = vshrl.u32 %v539, 7
    %v541 = vsub.s32 0, %v540
    %v542 = vrot.slane %v512, %v541
    %v543 = vlaneseq
    %v544 = vshrl.u32 %v543, 7
    %v545 = vsub.s32 0, %v544
    %v546 = vrot.slane %v514, %v545
    %v555 = vadd.f32 %v363, %v518
    %v556 = vadd.f32 %v364, %v522
    %v557 = vadd.f32 %v365, %v526
    %v558 = vadd.f32 %v366, %v530
    %v559 = vadd.f32 %v367, %v534
    %v560 = vadd.f32 %v368, %v538
    %v561 = vadd.f32 %v369, %v542
    %v562 = vadd.f32 %v370, %v546
    %v563 = vtanh.pop %v555
    %v564 = vtanh.pop %v556
    %v565 = vtanh.pop %v557
    %v566 = vtanh.pop %v558
    %v567 = vtanh.pop %v559
    %v568 = vtanh.pop %v560
    %v569 = vtanh.pop %v561
    %v570 = vtanh.pop %v562
    %v572 = vlaneseq
    %v573 = vshrl.u32 %v572, 7
    %v574 = vsub.s32 0, %v573
    %v575 = vrot.slane %v384, %v574
    %v577 = vmul.f32 %v563, %v575
    %v578 = vmul.f32 %v564, %v575
    %v579 = vmul.f32 %v565, %v575
    %v580 = vmul.f32 %v566, %v575
    %v581 = vmul.f32 %v567, %v575
    %v582 = vmul.f32 %v568, %v575
    %v583 = vmul.f32 %v569, %v575
    %v584 = vmul.f32 %v570, %v575
    %v585 = vsel %vm360, %v577, 0.0
    %586 = vadd.xlane.f32.xlu0 %v585
    %v587 = vpop.xlane.xlu0 %586
    %v588 = vsel %vm360, %v578, 0.0
    %589 = vadd.xlane.f32.xlu0 %v588
    %v590 = vpop.xlane.xlu0 %589
    %v591 = vsel %vm360, %v579, 0.0
    %592 = vadd.xlane.f32.xlu0 %v591
    %v593 = vpop.xlane.xlu0 %592
    %v594 = vsel %vm360, %v580, 0.0
    %595 = vadd.xlane.f32.xlu0 %v594
    %v596 = vpop.xlane.xlu0 %595
    %v597 = vsel %vm360, %v581, 0.0
    %598 = vadd.xlane.f32.xlu0 %v597
    %v599 = vpop.xlane.xlu0 %598
    %v600 = vsel %vm360, %v582, 0.0
    %601 = vadd.xlane.f32.xlu0 %v600
    %v602 = vpop.xlane.xlu0 %601
    %v603 = vsel %vm360, %v583, 0.0
    %604 = vadd.xlane.f32.xlu0 %v603
    %v605 = vpop.xlane.xlu0 %604
    %v606 = vsel %vm360, %v584, 0.0
    %607 = vadd.xlane.f32.xlu0 %v606
    %v608 = vpop.xlane.xlu0 %607
    %v610 = vlaneseq
    %v611 = vshrl.u32 %v610, 7
    %v612 = vsub.s32 0, %v611
    %v613 = vrot.slane %v385, %v612
    %615 = vbcast.lane.b32.xlu0 %v613, 256
    %v616 = vpop.permute.xlu0 %615
    %v617 = vlaneseq
    %v618 = vshrl.u32 %v617, 7
    %v619 = vsub.s32 1, %v618
    %v620 = vrot.slane %v385, %v619
    %622 = vbcast.lane.b32.xlu0 %v620, 256
    %v623 = vpop.permute.xlu0 %622
    %v624 = vlaneseq
    %v625 = vshrl.u32 %v624, 7
    %v626 = vsub.s32 2, %v625
    %v627 = vrot.slane %v385, %v626
    %629 = vbcast.lane.b32.xlu0 %v627, 256
    %v630 = vpop.permute.xlu0 %629
    %v631 = vlaneseq
    %v632 = vshrl.u32 %v631, 7
    %v633 = vsub.s32 3, %v632
    %v634 = vrot.slane %v385, %v633
    %636 = vbcast.lane.b32.xlu0 %v634, 256
    %v637 = vpop.permute.xlu0 %636
    %v638 = vlaneseq
    %v639 = vshrl.u32 %v638, 7
    %v640 = vsub.s32 4, %v639
    %v641 = vrot.slane %v385, %v640
    %643 = vbcast.lane.b32.xlu0 %v641, 256
    %v644 = vpop.permute.xlu0 %643
    %v645 = vlaneseq
    %v646 = vshrl.u32 %v645, 7
    %v647 = vsub.s32 5, %v646
    %v648 = vrot.slane %v385, %v647
    %650 = vbcast.lane.b32.xlu0 %v648, 256
    %v651 = vpop.permute.xlu0 %650
    %v652 = vlaneseq
    %v653 = vshrl.u32 %v652, 7
    %v654 = vsub.s32 6, %v653
    %v655 = vrot.slane %v385, %v654
    %657 = vbcast.lane.b32.xlu0 %v655, 256
    %v658 = vpop.permute.xlu0 %657
    %v659 = vlaneseq
    %v660 = vshrl.u32 %v659, 7
    %v661 = vsub.s32 7, %v660
    %v662 = vrot.slane %v385, %v661
    %664 = vbcast.lane.b32.xlu0 %v662, 256
    %v665 = vpop.permute.xlu0 %664
    %v674 = vadd.f32 %v587, %v616
    %v675 = vadd.f32 %v590, %v623
    %v676 = vadd.f32 %v593, %v630
    %v677 = vadd.f32 %v596, %v637
    %v678 = vadd.f32 %v599, %v644
    %v679 = vadd.f32 %v602, %v651
    %v680 = vadd.f32 %v605, %v658
    %v681 = vadd.f32 %v608, %v665
    %690 = vset.pattern.permute.xlu0 0
    %691 = vperm.xlu0 %690, %v674
    %v692 = vpop.permute.xlu0 %691
    %693 = vset.pattern.permute.xlu0 0
    %694 = vperm.xlu0 %693, %v675
    %v695 = vpop.permute.xlu0 %694
    %696 = vset.pattern.permute.xlu0 0
    %697 = vperm.xlu0 %696, %v676
    %v698 = vpop.permute.xlu0 %697
    %699 = vset.pattern.permute.xlu0 0
    %700 = vperm.xlu0 %699, %v677
    %v701 = vpop.permute.xlu0 %700
    %702 = vset.pattern.permute.xlu0 0
    %703 = vperm.xlu0 %702, %v678
    %v704 = vpop.permute.xlu0 %703
    %705 = vset.pattern.permute.xlu0 0
    %706 = vperm.xlu0 %705, %v679
    %v707 = vpop.permute.xlu0 %706
    %708 = vset.pattern.permute.xlu0 0
    %709 = vperm.xlu0 %708, %v680
    %v710 = vpop.permute.xlu0 %709
    %711 = vset.pattern.permute.xlu0 0
    %712 = vperm.xlu0 %711, %v681
    %v713 = vpop.permute.xlu0 %712
    %v714 = vlaneseq
    %v715 = vand.u32 %v714, 127
    %v716 = vlaneseq
    %v717 = vshrl.u32 %v716, 7
    %v718 = vsub.s32 %v715, %v717
    %v719 = vrot.slane %v692, %v718
    %v720 = vlaneseq
    %v721 = vshrl.u32 %v720, 7
    %v722 = vsub.s32 %v715, %v721
    %v723 = vrot.slane %v695, %v722
    %v724 = vlaneseq
    %v725 = vshrl.u32 %v724, 7
    %v726 = vsub.s32 %v715, %v725
    %v727 = vrot.slane %v698, %v726
    %v728 = vlaneseq
    %v729 = vshrl.u32 %v728, 7
    %v730 = vsub.s32 %v715, %v729
    %v731 = vrot.slane %v701, %v730
    %v732 = vlaneseq
    %v733 = vshrl.u32 %v732, 7
    %v734 = vsub.s32 %v715, %v733
    %v735 = vrot.slane %v704, %v734
    %v736 = vlaneseq
    %v737 = vshrl.u32 %v736, 7
    %v738 = vsub.s32 %v715, %v737
    %v739 = vrot.slane %v707, %v738
    %v740 = vlaneseq
    %v741 = vshrl.u32 %v740, 7
    %v742 = vsub.s32 %v715, %v741
    %v743 = vrot.slane %v710, %v742
    %v744 = vlaneseq
    %v745 = vshrl.u32 %v744, 7
    %v746 = vsub.s32 %v715, %v745
    %v747 = vrot.slane %v713, %v746
    %vm748 = vcmask 1041409
    %v749 = vsel %vm748, %v723, %v719
    %vm750 = vcmask 1042434
    %v751 = vsel %vm750, %v727, %v749
    %vm752 = vcmask 1043459
    %v753 = vsel %vm752, %v731, %v751
    %vm754 = vcmask 1044484
    %v755 = vsel %vm754, %v735, %v753
    %vm756 = vcmask 1045509
    %v757 = vsel %vm756, %v739, %v755
    %vm758 = vcmask 1046534
    %v759 = vsel %vm758, %v743, %v757
    %vm760 = vcmask 1047559
    %v761 = vsel %vm760, %v747, %v759
    %vm763 = vcmask 64512
    %v764 = vsel %vm763, %v761, -inf
    %765 = vmax.xlane.f32.xlu0 %v764
    %v766 = vpop.xlane.xlu0 %765
    %v768 = vlaneseq
    %v769 = vshrl.u32 %v768, 7
    %v770 = vsub.s32 0, %v769
    %v771 = vrot.slane %v766, %v770
    %v772 = vlaneseq
    %v773 = vshrl.u32 %v772, 7
    %v774 = vsub.s32 1, %v773
    %v775 = vrot.slane %v766, %v774
    %v776 = vlaneseq
    %v777 = vshrl.u32 %v776, 7
    %v778 = vsub.s32 2, %v777
    %v779 = vrot.slane %v766, %v778
    %v780 = vlaneseq
    %v781 = vshrl.u32 %v780, 7
    %v782 = vsub.s32 3, %v781
    %v783 = vrot.slane %v766, %v782
    %v784 = vlaneseq
    %v785 = vshrl.u32 %v784, 7
    %v786 = vsub.s32 4, %v785
    %v787 = vrot.slane %v766, %v786
    %v788 = vlaneseq
    %v789 = vshrl.u32 %v788, 7
    %v790 = vsub.s32 5, %v789
    %v791 = vrot.slane %v766, %v790
    %v792 = vlaneseq
    %v793 = vshrl.u32 %v792, 7
    %v794 = vsub.s32 6, %v793
    %v795 = vrot.slane %v766, %v794
    %v796 = vlaneseq
    %v797 = vshrl.u32 %v796, 7
    %v798 = vsub.s32 7, %v797
    %v799 = vrot.slane %v766, %v798
    %v808 = vsub.f32 %v674, %v771
    %v809 = vsub.f32 %v675, %v775
    %v810 = vsub.f32 %v676, %v779
    %v811 = vsub.f32 %v677, %v783
    %v812 = vsub.f32 %v678, %v787
    %v813 = vsub.f32 %v679, %v791
    %v814 = vsub.f32 %v680, %v795
    %v815 = vsub.f32 %v681, %v799
    %v816 = vmul.f32 %v808, 1.442695
    %v817 = vpow.pop %v816
    %v818 = vmul.f32 %v809, 1.442695
    %v819 = vpow.pop %v818
    %v820 = vmul.f32 %v810, 1.442695
    %v821 = vpow.pop %v820
    %v822 = vmul.f32 %v811, 1.442695
    %v823 = vpow.pop %v822
    %v824 = vmul.f32 %v812, 1.442695
    %v825 = vpow.pop %v824
    %v826 = vmul.f32 %v813, 1.442695
    %v827 = vpow.pop %v826
    %v828 = vmul.f32 %v814, 1.442695
    %v829 = vpow.pop %v828
    %v830 = vmul.f32 %v815, 1.442695
    %v831 = vpow.pop %v830
    %840 = vset.pattern.permute.xlu0 0
    %841 = vperm.xlu0 %840, %v817
    %v842 = vpop.permute.xlu0 %841
    %843 = vset.pattern.permute.xlu0 0
    %844 = vperm.xlu0 %843, %v819
    %v845 = vpop.permute.xlu0 %844
    %846 = vset.pattern.permute.xlu0 0
    %847 = vperm.xlu0 %846, %v821
    %v848 = vpop.permute.xlu0 %847
    %849 = vset.pattern.permute.xlu0 0
    %850 = vperm.xlu0 %849, %v823
    %v851 = vpop.permute.xlu0 %850
    %852 = vset.pattern.permute.xlu0 0
    %853 = vperm.xlu0 %852, %v825
    %v854 = vpop.permute.xlu0 %853
    %855 = vset.pattern.permute.xlu0 0
    %856 = vperm.xlu0 %855, %v827
    %v857 = vpop.permute.xlu0 %856
    %858 = vset.pattern.permute.xlu0 0
    %859 = vperm.xlu0 %858, %v829
    %v860 = vpop.permute.xlu0 %859
    %861 = vset.pattern.permute.xlu0 0
    %862 = vperm.xlu0 %861, %v831
    %v863 = vpop.permute.xlu0 %862
    %v864 = vlaneseq
    %v865 = vshrl.u32 %v864, 7
    %v866 = vsub.s32 %v715, %v865
    %v867 = vrot.slane %v842, %v866
    %v868 = vlaneseq
    %v869 = vshrl.u32 %v868, 7
    %v870 = vsub.s32 %v715, %v869
    %v871 = vrot.slane %v845, %v870
    %v872 = vlaneseq
    %v873 = vshrl.u32 %v872, 7
    %v874 = vsub.s32 %v715, %v873
    %v875 = vrot.slane %v848, %v874
    %v876 = vlaneseq
    %v877 = vshrl.u32 %v876, 7
    %v878 = vsub.s32 %v715, %v877
    %v879 = vrot.slane %v851, %v878
    %v880 = vlaneseq
    %v881 = vshrl.u32 %v880, 7
    %v882 = vsub.s32 %v715, %v881
    %v883 = vrot.slane %v854, %v882
    %v884 = vlaneseq
    %v885 = vshrl.u32 %v884, 7
    %v886 = vsub.s32 %v715, %v885
    %v887 = vrot.slane %v857, %v886
    %v888 = vlaneseq
    %v889 = vshrl.u32 %v888, 7
    %v890 = vsub.s32 %v715, %v889
    %v891 = vrot.slane %v860, %v890
    %v892 = vlaneseq
    %v893 = vshrl.u32 %v892, 7
    %v894 = vsub.s32 %v715, %v893
    %v895 = vrot.slane %v863, %v894
    %v896 = vsel %vm748, %v871, %v867
    %v897 = vsel %vm750, %v875, %v896
    %v898 = vsel %vm752, %v879, %v897
    %v899 = vsel %vm754, %v883, %v898
    %v900 = vsel %vm756, %v887, %v899
    %v901 = vsel %vm758, %v891, %v900
    %v902 = vsel %vm760, %v895, %v901
    %v904 = vsel %vm763, %v902, 0.0
    %905 = vadd.xlane.f32.xlu0 %v904
    %v906 = vpop.xlane.xlu0 %905
    %v907 = vrcp.pop %v906
    %v909 = vlaneseq
    %v910 = vshrl.u32 %v909, 7
    %v911 = vsub.s32 0, %v910
    %v912 = vrot.slane %v907, %v911
    %v913 = vlaneseq
    %v914 = vshrl.u32 %v913, 7
    %v915 = vsub.s32 1, %v914
    %v916 = vrot.slane %v907, %v915
    %v917 = vlaneseq
    %v918 = vshrl.u32 %v917, 7
    %v919 = vsub.s32 2, %v918
    %v920 = vrot.slane %v907, %v919
    %v921 = vlaneseq
    %v922 = vshrl.u32 %v921, 7
    %v923 = vsub.s32 3, %v922
    %v924 = vrot.slane %v907, %v923
    %v925 = vlaneseq
    %v926 = vshrl.u32 %v925, 7
    %v927 = vsub.s32 4, %v926
    %v928 = vrot.slane %v907, %v927
    %v929 = vlaneseq
    %v930 = vshrl.u32 %v929, 7
    %v931 = vsub.s32 5, %v930
    %v932 = vrot.slane %v907, %v931
    %v933 = vlaneseq
    %v934 = vshrl.u32 %v933, 7
    %v935 = vsub.s32 6, %v934
    %v936 = vrot.slane %v907, %v935
    %v937 = vlaneseq
    %v938 = vshrl.u32 %v937, 7
    %v939 = vsub.s32 7, %v938
    %v940 = vrot.slane %v907, %v939
    %v949 = vmul.f32 %v817, %v912
    %v950 = vmul.f32 %v819, %v916
    %v951 = vmul.f32 %v821, %v920
    %v952 = vmul.f32 %v823, %v924
    %v953 = vmul.f32 %v825, %v928
    %v954 = vmul.f32 %v827, %v932
    %v955 = vmul.f32 %v829, %v936
    %v956 = vmul.f32 %v831, %v940
    %958 = vset.pattern.permute.xlu0 0
    %959 = vperm.xlu0 %958, %v949
    %v960 = vpop.permute.xlu0 %959
    %963 = vset.pattern.permute.xlu0 0
    %964 = vperm.xlu0 %963, %v950
    %v965 = vpop.permute.xlu0 %964
    %968 = vset.pattern.permute.xlu0 0
    %969 = vperm.xlu0 %968, %v951
    %v970 = vpop.permute.xlu0 %969
    %973 = vset.pattern.permute.xlu0 0
    %974 = vperm.xlu0 %973, %v952
    %v975 = vpop.permute.xlu0 %974
    %978 = vset.pattern.permute.xlu0 0
    %979 = vperm.xlu0 %978, %v953
    %v980 = vpop.permute.xlu0 %979
    %983 = vset.pattern.permute.xlu0 0
    %984 = vperm.xlu0 %983, %v954
    %v985 = vpop.permute.xlu0 %984
    %988 = vset.pattern.permute.xlu0 0
    %989 = vperm.xlu0 %988, %v955
    %v990 = vpop.permute.xlu0 %989
    %993 = vset.pattern.permute.xlu0 0
    %994 = vperm.xlu0 %993, %v956
    %v995 = vpop.permute.xlu0 %994
    %v997 = vmul.f32 %v960, %v371
    %v998 = vmul.f32 %v965, %v372
    %v999 = vmul.f32 %v970, %v373
    %v1000 = vmul.f32 %v975, %v374
    %v1001 = vmul.f32 %v980, %v375
    %v1002 = vmul.f32 %v985, %v376
    %v1003 = vmul.f32 %v990, %v377
    %v1004 = vmul.f32 %v995, %v378
    %v1005 = vsel %vm360, %v997, 0.0
    %v1006 = vrot.slane %v1005, 4
    %v1007 = vadd.f32 %v1005, %v1006
    %v1008 = vrot.slane %v1007, 2
    %v1009 = vadd.f32 %v1007, %v1008
    %v1010 = vrot.slane %v1009, 1
    %v1011 = vadd.f32 %v1009, %v1010
    %v1012 = vsel %vm360, %v998, 0.0
    %v1013 = vrot.slane %v1012, 4
    %v1014 = vadd.f32 %v1012, %v1013
    %v1015 = vrot.slane %v1014, 2
    %v1016 = vadd.f32 %v1014, %v1015
    %v1017 = vrot.slane %v1016, 1
    %v1018 = vadd.f32 %v1016, %v1017
    %v1019 = vsel %vm360, %v999, 0.0
    %v1020 = vrot.slane %v1019, 4
    %v1021 = vadd.f32 %v1019, %v1020
    %v1022 = vrot.slane %v1021, 2
    %v1023 = vadd.f32 %v1021, %v1022
    %v1024 = vrot.slane %v1023, 1
    %v1025 = vadd.f32 %v1023, %v1024
    %v1026 = vsel %vm360, %v1000, 0.0
    %v1027 = vrot.slane %v1026, 4
    %v1028 = vadd.f32 %v1026, %v1027
    %v1029 = vrot.slane %v1028, 2
    %v1030 = vadd.f32 %v1028, %v1029
    %v1031 = vrot.slane %v1030, 1
    %v1032 = vadd.f32 %v1030, %v1031
    %v1033 = vsel %vm360, %v1001, 0.0
    %v1034 = vrot.slane %v1033, 4
    %v1035 = vadd.f32 %v1033, %v1034
    %v1036 = vrot.slane %v1035, 2
    %v1037 = vadd.f32 %v1035, %v1036
    %v1038 = vrot.slane %v1037, 1
    %v1039 = vadd.f32 %v1037, %v1038
    %v1040 = vsel %vm360, %v1002, 0.0
    %v1041 = vrot.slane %v1040, 4
    %v1042 = vadd.f32 %v1040, %v1041
    %v1043 = vrot.slane %v1042, 2
    %v1044 = vadd.f32 %v1042, %v1043
    %v1045 = vrot.slane %v1044, 1
    %v1046 = vadd.f32 %v1044, %v1045
    %v1047 = vsel %vm360, %v1003, 0.0
    %v1048 = vrot.slane %v1047, 4
    %v1049 = vadd.f32 %v1047, %v1048
    %v1050 = vrot.slane %v1049, 2
    %v1051 = vadd.f32 %v1049, %v1050
    %v1052 = vrot.slane %v1051, 1
    %v1053 = vadd.f32 %v1051, %v1052
    %v1054 = vsel %vm360, %v1004, 0.0
    %v1055 = vrot.slane %v1054, 4
    %v1056 = vadd.f32 %v1054, %v1055
    %v1057 = vrot.slane %v1056, 2
    %v1058 = vadd.f32 %v1056, %v1057
    %v1059 = vrot.slane %v1058, 1
    %v1060 = vadd.f32 %v1058, %v1059
    %v1069 = vsel %vm748, %v1018, %v1011
    %v1070 = vsel %vm750, %v1025, %v1069
    %v1071 = vsel %vm752, %v1032, %v1070
    %v1072 = vsel %vm754, %v1039, %v1071
    %v1073 = vsel %vm756, %v1046, %v1072
    %v1074 = vsel %vm758, %v1053, %v1073
    %v1075 = vsel %vm760, %v1060, %v1074
    %v1076 = vsel %vm360, %v1075, 0
    %1078 = vmatprep.subr.mxu0 0.0
    %1079 = vmatpush1.msra.mxu0 0.0
    %1080 = vmatprep.subr.mxu0 0.0
    %1081 = vmatpush1.msra.mxu0 0.0
    %1082 = vmatprep.subr.mxu0 0.0
    %1083 = vmatpush1.msra.mxu0 0.0
    %1084 = vmatprep.subr.mxu0 0.0
    %1085 = vmatpush1.msra.mxu0 0.0
    %1086 = vmatprep.subr.mxu0 0.0
    %1087 = vmatpush1.msra.mxu0 0.0
    %1088 = vmatprep.subr.mxu0 0.0
    %1089 = vmatpush1.msra.mxu0 0.0
    %1090 = vmatprep.subr.mxu0 0.0
    %1091 = vmatpush1.msra.mxu0 0.0
    %1092 = vmatprep.subr.mxu0 0.0
    %1093 = vmatpush1.msra.mxu0 0.0
    %1094 = vmatprep.subr.mxu0 0.0
    %1095 = vmatpush1.msra.mxu0 0.0
    %1096 = vmatprep.subr.mxu0 0.0
    %1097 = vmatpush1.msra.mxu0 0.0
    %1098 = vmatprep.subr.mxu0 0.0
    %1099 = vmatpush1.msra.mxu0 0.0
    %1100 = vmatprep.subr.mxu0 0.0
    %1101 = vmatpush1.msra.mxu0 0.0
    %1102 = vmatprep.subr.mxu0 0.0
    %1103 = vmatpush1.msra.mxu0 %v382
    %1104 = vmatprep.subr.mxu0 0.0
    %1105 = vmatpush1.msra.mxu0 %v381
    %1106 = vmatprep.subr.mxu0 0.0
    %1107 = vmatpush1.msra.mxu0 %v380
    %1108 = vmatprep.subr.mxu0 0.0
    %1109 = vmatpush1.msra.mxu0 %v379
    %1110 = vmatprep.subr.mxu0 0.0
    %1111 = vmatpush2.msra.mxu0 0.0
    %1112 = vmatprep.subr.mxu0 0.0
    %1113 = vmatpush2.msra.mxu0 0.0
    %1114 = vmatprep.subr.mxu0 0.0
    %1115 = vmatpush2.msra.mxu0 0.0
    %1116 = vmatprep.subr.mxu0 0.0
    %1117 = vmatpush2.msra.mxu0 0.0
    %1118 = vmatprep.subr.mxu0 0.0
    %1119 = vmatpush2.msra.mxu0 0.0
    %1120 = vmatprep.subr.mxu0 0.0
    %1121 = vmatpush2.msra.mxu0 0.0
    %1122 = vmatprep.subr.mxu0 0.0
    %1123 = vmatpush2.msra.mxu0 0.0
    %1124 = vmatprep.subr.mxu0 0.0
    %1125 = vmatpush2.msra.mxu0 0.0
    %1126 = vmatprep.subr.mxu0 0.0
    %1127 = vmatpush2.msra.mxu0 0.0
    %1128 = vmatprep.subr.mxu0 0.0
    %1129 = vmatpush2.msra.mxu0 0.0
    %1130 = vmatprep.subr.mxu0 0.0
    %1131 = vmatpush2.msra.mxu0 0.0
    %1132 = vmatprep.subr.mxu0 0.0
    %1133 = vmatpush2.msra.mxu0 0.0
    %1134 = vmatprep.subr.mxu0 0.0
    %1135 = vmatpush2.msra.mxu0 0.0
    %1136 = vmatprep.subr.mxu0 0.0
    %1137 = vmatpush2.msra.mxu0 0.0
    %1138 = vmatprep.subr.mxu0 0.0
    %1139 = vmatpush2.msra.mxu0 0.0
    %1140 = vmatprep.subr.mxu0 0.0
    %1141 = vmatpush2.msra.mxu0 0.0
    %1142 = vmatprep.mubr.f32.mxu0 0.0
    %1143 = vmatmul.mubr.f32.gmra.mxu0 %v1076
    %v1144 = vpop.f32.mrf.mxu0
    %v1145 = vadd.f32 %v390, %v1144
    %v1146 = vpop.f32.mrf.mxu0
    %1147 = vdwg.mxu0
    %v1149 = vcombine.high %v1145, %v1145
    %v1151 = vunpack.c.l.s4 1966171168
    %v1152 = vunpack.c.0.s8 %v1151
    %v1153 = vlaneseq
    %v1154 = vshrl.u32 %v1153, 7
    %v1155 = vsub.s32 %v1152, %v1154
    %v1156 = vrot.slane %v1145, %v1155
    %v1158 = vunpack.c.l.s4 1966171168
    %v1159 = vunpack.c.0.s8 %v1158
    %v1160 = vlaneseq
    %v1161 = vshrl.u32 %v1160, 7
    %v1162 = vsub.s32 %v1159, %v1161
    %v1163 = vrot.slane %v1149, %v1162
    %v1164 = vcombine.high %v1156, %v1156
    %v1165 = vcombine.high %v1163, %v1163
    %v1167 = vunpack.c.l.s4 1966171168
    %v1168 = vunpack.c.0.s8 %v1167
    %v1169 = vlaneseq
    %v1170 = vshrl.u32 %v1169, 7
    %v1171 = vsub.s32 %v1168, %v1170
    %v1172 = vrot.slane %v1156, %v1171
    %v1174 = vunpack.c.l.s4 1966171168
    %v1175 = vunpack.c.0.s8 %v1174
    %v1176 = vlaneseq
    %v1177 = vshrl.u32 %v1176, 7
    %v1178 = vsub.s32 %v1175, %v1177
    %v1179 = vrot.slane %v1163, %v1178
    %v1181 = vunpack.c.l.s4 1966171168
    %v1182 = vunpack.c.0.s8 %v1181
    %v1183 = vlaneseq
    %v1184 = vshrl.u32 %v1183, 7
    %v1185 = vsub.s32 %v1182, %v1184
    %v1186 = vrot.slane %v1164, %v1185
    %v1188 = vunpack.c.l.s4 1966171168
    %v1189 = vunpack.c.0.s8 %v1188
    %v1190 = vlaneseq
    %v1191 = vshrl.u32 %v1190, 7
    %v1192 = vsub.s32 %v1189, %v1191
    %v1193 = vrot.slane %v1165, %v1192
    %v1194 = vcombine.high %v1172, %v1172
    %v1195 = vcombine.high %v1179, %v1179
    %v1196 = vcombine.high %v1186, %v1186
    %v1197 = vcombine.high %v1193, %v1193
    %v1198 = vlaneseq
    %v1199 = vshrl.u32 %v1198, 7
    %v1200 = vsub.s32 0, %v1199
    %v1201 = vrot.slane %v1172, %v1200
    %v1202 = vlaneseq
    %v1203 = vshrl.u32 %v1202, 7
    %v1204 = vsub.s32 0, %v1203
    %v1205 = vrot.slane %v1186, %v1204
    %v1206 = vlaneseq
    %v1207 = vshrl.u32 %v1206, 7
    %v1208 = vsub.s32 0, %v1207
    %v1209 = vrot.slane %v1194, %v1208
    %v1210 = vlaneseq
    %v1211 = vshrl.u32 %v1210, 7
    %v1212 = vsub.s32 0, %v1211
    %v1213 = vrot.slane %v1196, %v1212
    %v1214 = vlaneseq
    %v1215 = vshrl.u32 %v1214, 7
    %v1216 = vsub.s32 0, %v1215
    %v1217 = vrot.slane %v1179, %v1216
    %v1218 = vlaneseq
    %v1219 = vshrl.u32 %v1218, 7
    %v1220 = vsub.s32 0, %v1219
    %v1221 = vrot.slane %v1193, %v1220
    %v1222 = vlaneseq
    %v1223 = vshrl.u32 %v1222, 7
    %v1224 = vsub.s32 0, %v1223
    %v1225 = vrot.slane %v1195, %v1224
    %v1226 = vlaneseq
    %v1227 = vshrl.u32 %v1226, 7
    %v1228 = vsub.s32 0, %v1227
    %v1229 = vrot.slane %v1197, %v1228
    %v1238 = vadd.f32 %v363, %v1201
    %v1239 = vadd.f32 %v364, %v1205
    %v1240 = vadd.f32 %v365, %v1209
    %v1241 = vadd.f32 %v366, %v1213
    %v1242 = vadd.f32 %v367, %v1217
    %v1243 = vadd.f32 %v368, %v1221
    %v1244 = vadd.f32 %v369, %v1225
    %v1245 = vadd.f32 %v370, %v1229
    %v1246 = vtanh.pop %v1238
    %v1247 = vtanh.pop %v1239
    %v1248 = vtanh.pop %v1240
    %v1249 = vtanh.pop %v1241
    %v1250 = vtanh.pop %v1242
    %v1251 = vtanh.pop %v1243
    %v1252 = vtanh.pop %v1244
    %v1253 = vtanh.pop %v1245
    %v1254 = vmul.f32 %v1246, %v575
    %v1255 = vmul.f32 %v1247, %v575
    %v1256 = vmul.f32 %v1248, %v575
    %v1257 = vmul.f32 %v1249, %v575
    %v1258 = vmul.f32 %v1250, %v575
    %v1259 = vmul.f32 %v1251, %v575
    %v1260 = vmul.f32 %v1252, %v575
    %v1261 = vmul.f32 %v1253, %v575
    %v1262 = vsel %vm360, %v1254, 0.0
    %1263 = vadd.xlane.f32.xlu0 %v1262
    %v1264 = vpop.xlane.xlu0 %1263
    %v1265 = vsel %vm360, %v1255, 0.0
    %1266 = vadd.xlane.f32.xlu0 %v1265
    %v1267 = vpop.xlane.xlu0 %1266
    %v1268 = vsel %vm360, %v1256, 0.0
    %1269 = vadd.xlane.f32.xlu0 %v1268
    %v1270 = vpop.xlane.xlu0 %1269
    %v1271 = vsel %vm360, %v1257, 0.0
    %1272 = vadd.xlane.f32.xlu0 %v1271
    %v1273 = vpop.xlane.xlu0 %1272
    %v1274 = vsel %vm360, %v1258, 0.0
    %1275 = vadd.xlane.f32.xlu0 %v1274
    %v1276 = vpop.xlane.xlu0 %1275
    %v1277 = vsel %vm360, %v1259, 0.0
    %1278 = vadd.xlane.f32.xlu0 %v1277
    %v1279 = vpop.xlane.xlu0 %1278
    %v1280 = vsel %vm360, %v1260, 0.0
    %1281 = vadd.xlane.f32.xlu0 %v1280
    %v1282 = vpop.xlane.xlu0 %1281
    %v1283 = vsel %vm360, %v1261, 0.0
    %1284 = vadd.xlane.f32.xlu0 %v1283
    %v1285 = vpop.xlane.xlu0 %1284
    %v1286 = vld [vmem:[#allocation10] sm:$0xff]
    %v1288 = vlaneseq
    %v1289 = vshrl.u32 %v1288, 7
    %v1290 = vsub.s32 0, %v1289
    %v1291 = vrot.slane %v1286, %v1290
    %1293 = vbcast.lane.b32.xlu0 %v1291, 256
    %v1294 = vpop.permute.xlu0 %1293
    %v1295 = vlaneseq
    %v1296 = vshrl.u32 %v1295, 7
    %v1297 = vsub.s32 1, %v1296
    %v1298 = vrot.slane %v1286, %v1297
    %1300 = vbcast.lane.b32.xlu0 %v1298, 256
    %v1301 = vpop.permute.xlu0 %1300
    %v1302 = vlaneseq
    %v1303 = vshrl.u32 %v1302, 7
    %v1304 = vsub.s32 2, %v1303
    %v1305 = vrot.slane %v1286, %v1304
    %1307 = vbcast.lane.b32.xlu0 %v1305, 256
    %v1308 = vpop.permute.xlu0 %1307
    %v1309 = vlaneseq
    %v1310 = vshrl.u32 %v1309, 7
    %v1311 = vsub.s32 3, %v1310
    %v1312 = vrot.slane %v1286, %v1311
    %1314 = vbcast.lane.b32.xlu0 %v1312, 256
    %v1315 = vpop.permute.xlu0 %1314
    %v1316 = vlaneseq
    %v1317 = vshrl.u32 %v1316, 7
    %v1318 = vsub.s32 4, %v1317
    %v1319 = vrot.slane %v1286, %v1318
    %1321 = vbcast.lane.b32.xlu0 %v1319, 256
    %v1322 = vpop.permute.xlu0 %1321
    %v1323 = vlaneseq
    %v1324 = vshrl.u32 %v1323, 7
    %v1325 = vsub.s32 5, %v1324
    %v1326 = vrot.slane %v1286, %v1325
    %1328 = vbcast.lane.b32.xlu0 %v1326, 256
    %v1329 = vpop.permute.xlu0 %1328
    %v1330 = vlaneseq
    %v1331 = vshrl.u32 %v1330, 7
    %v1332 = vsub.s32 6, %v1331
    %v1333 = vrot.slane %v1286, %v1332
    %1335 = vbcast.lane.b32.xlu0 %v1333, 256
    %v1336 = vpop.permute.xlu0 %1335
    %v1337 = vlaneseq
    %v1338 = vshrl.u32 %v1337, 7
    %v1339 = vsub.s32 7, %v1338
    %v1340 = vrot.slane %v1286, %v1339
    %1342 = vbcast.lane.b32.xlu0 %v1340, 256
    %v1343 = vpop.permute.xlu0 %1342
    %v1352 = vadd.f32 %v1264, %v1294
    %v1353 = vadd.f32 %v1267, %v1301
    %v1354 = vadd.f32 %v1270, %v1308
    %v1355 = vadd.f32 %v1273, %v1315
    %v1356 = vadd.f32 %v1276, %v1322
    %v1357 = vadd.f32 %v1279, %v1329
    %v1358 = vadd.f32 %v1282, %v1336
    %v1359 = vadd.f32 %v1285, %v1343
    %1368 = vset.pattern.permute.xlu0 0
    %1369 = vperm.xlu0 %1368, %v1352
    %v1370 = vpop.permute.xlu0 %1369
    %1371 = vset.pattern.permute.xlu0 0
    %1372 = vperm.xlu0 %1371, %v1353
    %v1373 = vpop.permute.xlu0 %1372
    %1374 = vset.pattern.permute.xlu0 0
    %1375 = vperm.xlu0 %1374, %v1354
    %v1376 = vpop.permute.xlu0 %1375
    %1377 = vset.pattern.permute.xlu0 0
    %1378 = vperm.xlu0 %1377, %v1355
    %v1379 = vpop.permute.xlu0 %1378
    %1380 = vset.pattern.permute.xlu0 0
    %1381 = vperm.xlu0 %1380, %v1356
    %v1382 = vpop.permute.xlu0 %1381
    %1383 = vset.pattern.permute.xlu0 0
    %1384 = vperm.xlu0 %1383, %v1357
    %v1385 = vpop.permute.xlu0 %1384
    %1386 = vset.pattern.permute.xlu0 0
    %1387 = vperm.xlu0 %1386, %v1358
    %v1388 = vpop.permute.xlu0 %1387
    %1389 = vset.pattern.permute.xlu0 0
    %1390 = vperm.xlu0 %1389, %v1359
    %v1391 = vpop.permute.xlu0 %1390
    %v1392 = vlaneseq
    %v1393 = vshrl.u32 %v1392, 7
    %v1394 = vsub.s32 %v715, %v1393
    %v1395 = vrot.slane %v1370, %v1394
    %v1396 = vlaneseq
    %v1397 = vshrl.u32 %v1396, 7
    %v1398 = vsub.s32 %v715, %v1397
    %v1399 = vrot.slane %v1373, %v1398
    %v1400 = vlaneseq
    %v1401 = vshrl.u32 %v1400, 7
    %v1402 = vsub.s32 %v715, %v1401
    %v1403 = vrot.slane %v1376, %v1402
    %v1404 = vlaneseq
    %v1405 = vshrl.u32 %v1404, 7
    %v1406 = vsub.s32 %v715, %v1405
    %v1407 = vrot.slane %v1379, %v1406
    %v1408 = vlaneseq
    %v1409 = vshrl.u32 %v1408, 7
    %v1410 = vsub.s32 %v715, %v1409
    %v1411 = vrot.slane %v1382, %v1410
    %v1412 = vlaneseq
    %v1413 = vshrl.u32 %v1412, 7
    %v1414 = vsub.s32 %v715, %v1413
    %v1415 = vrot.slane %v1385, %v1414
    %v1416 = vlaneseq
    %v1417 = vshrl.u32 %v1416, 7
    %v1418 = vsub.s32 %v715, %v1417
    %v1419 = vrot.slane %v1388, %v1418
    %v1420 = vlaneseq
    %v1421 = vshrl.u32 %v1420, 7
    %v1422 = vsub.s32 %v715, %v1421
    %v1423 = vrot.slane %v1391, %v1422
    %v1424 = vsel %vm748, %v1399, %v1395
    %v1425 = vsel %vm750, %v1403, %v1424
    %v1426 = vsel %vm752, %v1407, %v1425
    %v1427 = vsel %vm754, %v1411, %v1426
    %v1428 = vsel %vm756, %v1415, %v1427
    %v1429 = vsel %vm758, %v1419, %v1428
    %v1430 = vsel %vm760, %v1423, %v1429
    %1432 = vst.msk [vmem:[#allocation14] sm:$0xff] %vm763, %v1430
    // Predicated region
    $region70: #{tpu_custom_call.1} parent=1 // pred_check
      _
    $region71: #{tpu_custom_call.1} parent=1 // pred_check_branch
      %1434 = sbr.rel (0) target = $region73
    $region72: #{tpu_custom_call.1} parent=1 // pred_region
      %s1436 = ssub.s32 128, 128
      %1437 = vsyncadd [#allocation4], %s1436
      %s1439 = sshll.u32 [#allocation14], 4
      %s1440 = int_to_ptr.vmem [resolvable:$true] %s1439
      %1442 = dma.vmem_to_hbm [thread:$0]  %s1440, 128, %s10, [#allocation4]
    $region73: #{tpu_custom_call.1} parent=1 // pred_fallthru
      _
    // Predicated region
    $region74: #{tpu_custom_call.1} parent=1 // pred_check
      _
    $region75: #{tpu_custom_call.1} parent=1 // pred_check_branch
      %1444 = sbr.rel (0) target = $region77
    $region76: #{tpu_custom_call.1} parent=1 // pred_region
      %s1446 = ssub.s32 128, 128
      %1447 = vsyncadd [#allocation16], %s1446
      %s1449 = sshll.u32 [#allocation15], 4
      %s1450 = int_to_ptr.vmem [resolvable:$true] %s1449
      %1452 = dma.vmem_to_hbm [thread:$0]  %s1450, 128, %s11, [#allocation16]
    $region77: #{tpu_custom_call.1} parent=1 // pred_fallthru
      _
    // Predicated region
    $region78: #{tpu_custom_call.1} parent=1 // pred_check
      _
    $region79: #{tpu_custom_call.1} parent=1 // pred_check_branch
      %1454 = sbr.rel (0) target = $region81
    $region80: #{tpu_custom_call.1} parent=1 // pred_region
      %1455 = dma.done [#allocation4], 128
    $region81: #{tpu_custom_call.1} parent=1 // pred_fallthru
      _
    // Predicated region
    $region82: #{tpu_custom_call.1} parent=1 // pred_check
      _
    $region83: #{tpu_custom_call.1} parent=1 // pred_check_branch
      %1457 = sbr.rel (0) target = $region85
    $region84: #{tpu_custom_call.1} parent=1 // pred_region
      %1458 = dma.done [#allocation16], 128
    $region85: #{tpu_custom_call.1} parent=1 // pred_fallthru
      _
    %1459 = vsyncpa [#allocation3], 1
    %1460 = vsyncpa [#allocation6], 1
    %1461 = vsyncpa [#allocation9], 1
    %1462 = vsyncpa [#allocation12], 1
    %1463 = vsyncpa [#allocation4], 1
    %1464 = vsyncpa [#allocation16], 1

</llo_original>
